<compile_context>
chip_gen: v7x
topology: tpu7x:2x2x1
jax: 0.10.0
libtpu: 0.0.40
codegen_flags: <defaults>
</compile_context>

<pallas_src>
import functools

import jax
import jax.numpy as jnp
from jax.experimental import pallas as pl
from jax.experimental.pallas import tpu as pltpu


LANE = 128      # pad feature dims to multiples of the lane width
SUBLANE = 8     # batch tiles are multiples of the sublane width


def _round_up(x, m):
    return (x + m - 1) // m * m


def _pad_to(a, shape):
    pads = [(0, t - s) for s, t in zip(a.shape, shape)]
    if all(p == (0, 0) for p in pads):
        return a
    return jnp.pad(a, pads)


# --------------------------------------------------------------------------
# Kernel body: one batch tile through the whole FCNet stack, all weights
# VMEM-resident (bf16 operands, f32 MXU accumulation, f32 VPU bias/ReLU/add).
# --------------------------------------------------------------------------
def fcnet_kernel(x_ref, w_in_ref, b_in_ref,
                 w1_ref, b1_ref, w2_ref, b2_ref,
                 w_out_ref, o_ref):
    cd = w_in_ref.dtype                      # bf16 compute dtype for the MXU
    x = x_ref[...]                           # (tile_m, NIp) f32

    # Input linear + ReLU
    h = jnp.dot(x.astype(cd), w_in_ref[...], preferred_element_type=jnp.float32)
    h = jnp.maximum(h + b_in_ref[...], 0.0)

    # Residual layers, statically unrolled (layer count is a compile-time const)
    num_layers = w1_ref.shape[0]
    for l in range(num_layers):
        y = jnp.dot(h.astype(cd), w1_ref[l], preferred_element_type=jnp.float32)
        y = jnp.maximum(y + b1_ref[l], 0.0)
        # TODO(synk): nn.Dropout() is identity in eval mode; training-mode dropout
        # would need pltpu.prng_seed / pltpu.prng_random_bits masking here.
        y = jnp.dot(y.astype(cd), w2_ref[l], preferred_element_type=jnp.float32)
        y = jnp.maximum(y + b2_ref[l], 0.0)
        h = h + y                            # residual add, f32

    # class_emb linear (no bias)
    out = jnp.dot(h.astype(cd), w_out_ref[...], preferred_element_type=jnp.float32)
    o_ref[...] = out.astype(o_ref.dtype)


# --------------------------------------------------------------------------
# One-time weight re-layout (call at model load, NOT per forward).
# Torch nn.Linear is x @ W^T + b: transpose to x @ W form, lane-pad, cast.
# --------------------------------------------------------------------------
def prepare_fcnet_params(w_in, b_in, res_w1, res_b1, res_w2, res_b2, w_out,
                         compute_dtype=jnp.bfloat16):
    D, NI = w_in.shape
    C = w_out.shape[0]
    L = res_w1.shape[0]

    NIp = _round_up(NI, LANE)
    Dp = _round_up(D, LANE)
    Cp = _round_up(C, LANE)

    params = dict(
        w_in=_pad_to(w_in.T, (NIp, Dp)).astype(compute_dtype),
        b_in=_pad_to(b_in.reshape(1, D), (1, Dp)).astype(jnp.float32),
        w1=_pad_to(jnp.transpose(res_w1, (0, 2, 1)), (L, Dp, Dp)).astype(compute_dtype),
        b1=_pad_to(res_b1.reshape(L, 1, D), (L, 1, Dp)).astype(jnp.float32),
        w2=_pad_to(jnp.transpose(res_w2, (0, 2, 1)), (L, Dp, Dp)).astype(compute_dtype),
        b2=_pad_to(res_b2.reshape(L, 1, D), (L, 1, Dp)).astype(jnp.float32),
        w_out=_pad_to(w_out.T, (Dp, Cp)).astype(compute_dtype),
    )
    meta = dict(num_inputs=NI, num_classes=C)
    return params, meta


# --------------------------------------------------------------------------
# Fused forward pass.  `params` are the pre-laid-out weights from
# prepare_fcnet_params; no per-call transpose/pad/cast happens here.
# --------------------------------------------------------------------------
@functools.partial(jax.jit, static_argnames=("num_classes", "tile_m"))
def fcnet_forward(x, params, *, num_classes, tile_m=None):
    B = x.shape[0]
    NIp, Dp = params["w_in"].shape
    Cp = params["w_out"].shape[1]
    L = params["w1"].shape[0]
    C = num_classes

    # ---- batch tile selection -------------------------------------------
    # grid >= 2 when B > 16 so both v7x TensorCores get work; tiles are
    # multiples of 8 sublanes; cap at 512 rows for very large batches.
    if tile_m is None:
        if B <= 16:
            tile_m = _round_up(B, SUBLANE)
        elif B <= 1024:
            tile_m = _round_up(pl.cdiv(B, 2), SUBLANE)
        else:
            tile_m = 512

    # ---- VMEM budget (weights single-buffered, activations double-buffered)
    w_item = jnp.dtype(params["w_in"].dtype).itemsize
    weight_bytes = (params["w_in"].size + params["w1"].size
                    + params["w2"].size + params["w_out"].size) * w_item
    bias_bytes = (params["b_in"].size + params["b1"].size + params["b2"].size) * 4

    def _budget(tm):
        act = 2 * tm * (NIp + Cp) * 4        # double-buffered x / out blocks
        live = 3 * tm * Dp * 4               # h / y intermediates (f32)
        return weight_bytes + bias_bytes + act + live + (4 << 20)  # +scratch headroom

    try:
        vmem_cap = pltpu.get_tpu_info().vmem_capacity_bytes
    except Exception:
        vmem_cap = 64 << 20                  # conservative: v7x per-TC VMEM
    cap = vmem_cap - (8 << 20)               # leave room for Mosaic internals

    # Deliberate fallback: shrink tile_m until the budget fits (never silently
    # request less VMEM than the kernel actually needs).
    while _budget(tile_m) > cap and tile_m > SUBLANE:
        tile_m = max(SUBLANE, _round_up(tile_m // 2, SUBLANE))
    need = _budget(tile_m)
    if need > cap:
        # TODO(synk): for very large D*L, switch to per-layer pipelined weight
        # fetch (pltpu.emit_pipeline over l) instead of a fully resident stack.
        raise ValueError(
            f"FCNet weights ({weight_bytes >> 20} MiB) do not fit in VMEM "
            f"(cap {cap >> 20} MiB); per-layer weight pipelining required.")

    vmem_limit = min(cap, max(need, 32 << 20))

    # ---- pad batch / feature dims so every block & store is dense ---------
    grid_m = pl.cdiv(B, tile_m)
    Bp = grid_m * tile_m
    x_p = _pad_to(x, (Bp, NIp))

    resident = dict(pipeline_mode=pl.Buffered(1))   # grid-invariant: single-buffer

    out_padded = pl.pallas_call(
        fcnet_kernel,
        out_shape=jax.ShapeDtypeStruct((Bp, Cp), x.dtype),
        grid_spec=pltpu.PrefetchScalarGridSpec(
            num_scalar_prefetch=0,
            grid=(grid_m,),
            in_specs=[
                pl.BlockSpec((tile_m, NIp), lambda i: (i, 0)),                 # x tile
                pl.BlockSpec((NIp, Dp), lambda i: (0, 0), **resident),         # W_in^T
                pl.BlockSpec((1, Dp), lambda i: (0, 0), **resident),           # b_in
                pl.BlockSpec((L, Dp, Dp), lambda i: (0, 0, 0), **resident),    # W1^T stack
                pl.BlockSpec((L, 1, Dp), lambda i: (0, 0, 0), **resident),     # b1 stack
                pl.BlockSpec((L, Dp, Dp), lambda i: (0, 0, 0), **resident),    # W2^T stack
                pl.BlockSpec((L, 1, Dp), lambda i: (0, 0, 0), **resident),     # b2 stack
                pl.BlockSpec((Dp, Cp), lambda i: (0, 0), **resident),          # W_out^T
            ],
            out_specs=pl.BlockSpec((tile_m, Cp), lambda i: (i, 0)),
        ),
        compiler_params=pltpu.CompilerParams(
            dimension_semantics=("parallel",),
            vmem_limit_bytes=vmem_limit,
        ),
    )(x_p, params["w_in"], params["b_in"], params["w1"], params["b1"],
      params["w2"], params["b2"], params["w_out"])

    return out_padded[:B, :C]


# --------------------------------------------------------------------------
# Pure-JAX reference mirroring the kernel's mixed precision (bf16 MXU ops,
# f32 accumulation / elementwise).
# --------------------------------------------------------------------------
def fcnet_reference(x, w_in, b_in, res_w1, res_b1, res_w2, res_b2, w_out,
                    compute_dtype=jnp.bfloat16):
    cd = compute_dtype

    def linear(h, w, b=None):
        out = jnp.dot(h.astype(cd), w.T.astype(cd),
                      preferred_element_type=jnp.float32)
        return out if b is None else out + b

    h = jnp.maximum(linear(x, w_in, b_in), 0.0)
    for l in range(res_w1.shape[0]):
        y = jnp.maximum(linear(h, res_w1[l], res_b1[l]), 0.0)
        y = jnp.maximum(linear(y, res_w2[l], res_b2[l]), 0.0)
        h = h + y
    return linear(h, w_out).astype(x.dtype)


if __name__ == "__main__":
    key = jax.random.PRNGKey(0)
    # batch, num_inputs, dim_hidden, num_classes, #ResLayers (FCNet uses 4)
    B, NI, D, C, L = 32, 16, 256, 64, 4

    ks = iter(jax.random.split(key, 8))

    def uinit(kk, shape, fan_in):
        # mimic nn.Linear's U(-1/sqrt(fan_in), 1/sqrt(fan_in)) init
        bound = 1.0 / jnp.sqrt(jnp.float32(fan_in))
        return jax.random.uniform(kk, shape, jnp.float32, -bound, bound)

    x = jax.random.normal(next(ks), (B, NI), jnp.float32)
    w_in = uinit(next(ks), (D, NI), NI)
    b_in = uinit(next(ks), (D,), NI)
    res_w1 = uinit(next(ks), (L, D, D), D)
    res_b1 = uinit(next(ks), (L, D), D)
    res_w2 = uinit(next(ks), (L, D, D), D)
    res_b2 = uinit(next(ks), (L, D), D)
    w_out = uinit(next(ks), (C, D), D)

    # One-time weight re-layout (model load), then the fused forward.
    params, meta = prepare_fcnet_params(w_in, b_in, res_w1, res_b1,
                                        res_w2, res_b2, w_out)
    out = fcnet_forward(x, params, num_classes=meta["num_classes"])
    out = jax.block_until_ready(out)

    ref = fcnet_reference(x, w_in, b_in, res_w1, res_b1, res_w2, res_b2, w_out)
    assert out.shape == (B, C), out.shape
    assert jnp.allclose(out, ref, atol=5e-3, rtol=5e-3), "mismatch vs reference"

    print("KERNEL_OK")
</pallas_src>

<mosaic_0001>
module attributes {stable_mosaic.version = 11 : i64} {
  func.func @fcnet_kernel(%arg0: i32, %arg1: memref<16x128xf32, #tpu.memory_space<vmem>>, %arg2: memref<128x256xbf16, #tpu.memory_space<vmem>>, %arg3: memref<1x256xf32, #tpu.memory_space<vmem>>, %arg4: memref<4x256x256xbf16, #tpu.memory_space<vmem>>, %arg5: memref<4x1x256xf32, #tpu.memory_space<vmem>>, %arg6: memref<4x256x256xbf16, #tpu.memory_space<vmem>>, %arg7: memref<4x1x256xf32, #tpu.memory_space<vmem>>, %arg8: memref<256x128xbf16, #tpu.memory_space<vmem>>, %arg9: memref<16x128xf32, #tpu.memory_space<vmem>>) attributes {dimension_semantics = [#tpu.dimension_semantics<parallel>], iteration_bounds = array<i64: 2>, scalar_prefetch = 0 : i64, scratch_operands = 0 : i64, tpu.core_type = #tpu.core_type<tc>, window_params = [{transform_indices = @transform_0, window_bounds = array<i64: 16, 128>}, {pipeline_mode = #tpu.pipeline_mode<synchronous>, transform_indices = @transform_1, window_bounds = array<i64: 128, 256>}, {pipeline_mode = #tpu.pipeline_mode<synchronous>, transform_indices = @transform_2, window_bounds = array<i64: 1, 256>}, {pipeline_mode = #tpu.pipeline_mode<synchronous>, transform_indices = @transform_3, window_bounds = array<i64: 4, 256, 256>}, {pipeline_mode = #tpu.pipeline_mode<synchronous>, transform_indices = @transform_4, window_bounds = array<i64: 4, 1, 256>}, {pipeline_mode = #tpu.pipeline_mode<synchronous>, transform_indices = @transform_5, window_bounds = array<i64: 4, 256, 256>}, {pipeline_mode = #tpu.pipeline_mode<synchronous>, transform_indices = @transform_6, window_bounds = array<i64: 4, 1, 256>}, {pipeline_mode = #tpu.pipeline_mode<synchronous>, transform_indices = @transform_7, window_bounds = array<i64: 256, 128>}, {transform_indices = @transform_8, window_bounds = array<i64: 16, 128>}]} {
    %c0 = arith.constant 0 : index
    %c0_0 = arith.constant 0 : index
    %0 = vector.load %arg1[%c0, %c0_0] : memref<16x128xf32, #tpu.memory_space<vmem>>, vector<16x128xf32>
    %1 = arith.truncf %0 : vector<16x128xf32> to vector<16x128xbf16>
    %c0_1 = arith.constant 0 : index
    %c0_2 = arith.constant 0 : index
    %2 = vector.load %arg2[%c0_1, %c0_2] : memref<128x256xbf16, #tpu.memory_space<vmem>>, vector<128x256xbf16>
    %cst = arith.constant dense<0.000000e+00> : vector<16x256xf32>
    %3 = tpu.matmul %1, %2, %cst {dimension_numbers = #tpu.dot_dimension_numbers<[1], [0], [0], [1], [0, 0, 1, 1], [], []>} : vector<16x128xbf16>, vector<128x256xbf16>, vector<16x256xf32> -> vector<16x256xf32>
    %c0_3 = arith.constant 0 : index
    %c0_4 = arith.constant 0 : index
    %4 = vector.load %arg3[%c0_3, %c0_4] : memref<1x256xf32, #tpu.memory_space<vmem>>, vector<1x256xf32>
    %5 = vector.broadcast %4 : vector<1x256xf32> to vector<16x256xf32>
    %6 = arith.addf %3, %5 : vector<16x256xf32>
    %cst_5 = arith.constant 0.000000e+00 : f32
    %7 = vector.broadcast %cst_5 : f32 to vector<16x256xf32>
    %8 = arith.maximumf %6, %7 : vector<16x256xf32>
    %9 = arith.truncf %8 : vector<16x256xf32> to vector<16x256xbf16>
    %c0_6 = arith.constant 0 : index
    %c0_7 = arith.constant 0 : index
    %c0_8 = arith.constant 0 : index
    %10 = vector.load %arg4[%c0_6, %c0_7, %c0_8] : memref<4x256x256xbf16, #tpu.memory_space<vmem>>, vector<1x256x256xbf16>
    %11 = vector.shape_cast %10 : vector<1x256x256xbf16> to vector<256x256xbf16>
    %cst_9 = arith.constant dense<0.000000e+00> : vector<16x256xf32>
    %12 = tpu.matmul %9, %11, %cst_9 {dimension_numbers = #tpu.dot_dimension_numbers<[1], [0], [0], [1], [0, 0, 1, 1], [], []>} : vector<16x256xbf16>, vector<256x256xbf16>, vector<16x256xf32> -> vector<16x256xf32>
    %c0_10 = arith.constant 0 : index
    %c0_11 = arith.constant 0 : index
    %c0_12 = arith.constant 0 : index
    %13 = vector.load %arg5[%c0_10, %c0_11, %c0_12] : memref<4x1x256xf32, #tpu.memory_space<vmem>>, vector<1x1x256xf32>
    %14 = vector.shape_cast %13 : vector<1x1x256xf32> to vector<1x256xf32>
    %15 = vector.broadcast %14 : vector<1x256xf32> to vector<16x256xf32>
    %16 = arith.addf %12, %15 : vector<16x256xf32>
    %cst_13 = arith.constant 0.000000e+00 : f32
    %17 = vector.broadcast %cst_13 : f32 to vector<16x256xf32>
    %18 = arith.maximumf %16, %17 : vector<16x256xf32>
    %19 = arith.truncf %18 : vector<16x256xf32> to vector<16x256xbf16>
    %c0_14 = arith.constant 0 : index
    %c0_15 = arith.constant 0 : index
    %c0_16 = arith.constant 0 : index
    %20 = vector.load %arg6[%c0_14, %c0_15, %c0_16] : memref<4x256x256xbf16, #tpu.memory_space<vmem>>, vector<1x256x256xbf16>
    %21 = vector.shape_cast %20 : vector<1x256x256xbf16> to vector<256x256xbf16>
    %cst_17 = arith.constant dense<0.000000e+00> : vector<16x256xf32>
    %22 = tpu.matmul %19, %21, %cst_17 {dimension_numbers = #tpu.dot_dimension_numbers<[1], [0], [0], [1], [0, 0, 1, 1], [], []>} : vector<16x256xbf16>, vector<256x256xbf16>, vector<16x256xf32> -> vector<16x256xf32>
    %c0_18 = arith.constant 0 : index
    %c0_19 = arith.constant 0 : index
    %c0_20 = arith.constant 0 : index
    %23 = vector.load %arg7[%c0_18, %c0_19, %c0_20] : memref<4x1x256xf32, #tpu.memory_space<vmem>>, vector<1x1x256xf32>
    %24 = vector.shape_cast %23 : vector<1x1x256xf32> to vector<1x256xf32>
    %25 = vector.broadcast %24 : vector<1x256xf32> to vector<16x256xf32>
    %26 = arith.addf %22, %25 : vector<16x256xf32>
    %cst_21 = arith.constant 0.000000e+00 : f32
    %27 = vector.broadcast %cst_21 : f32 to vector<16x256xf32>
    %28 = arith.maximumf %26, %27 : vector<16x256xf32>
    %29 = arith.addf %8, %28 : vector<16x256xf32>
    %30 = arith.truncf %29 : vector<16x256xf32> to vector<16x256xbf16>
    %c1 = arith.constant 1 : index
    %c0_22 = arith.constant 0 : index
    %c0_23 = arith.constant 0 : index
    %31 = vector.load %arg4[%c1, %c0_22, %c0_23] : memref<4x256x256xbf16, #tpu.memory_space<vmem>>, vector<1x256x256xbf16>
    %32 = vector.shape_cast %31 : vector<1x256x256xbf16> to vector<256x256xbf16>
    %cst_24 = arith.constant dense<0.000000e+00> : vector<16x256xf32>
    %33 = tpu.matmul %30, %32, %cst_24 {dimension_numbers = #tpu.dot_dimension_numbers<[1], [0], [0], [1], [0, 0, 1, 1], [], []>} : vector<16x256xbf16>, vector<256x256xbf16>, vector<16x256xf32> -> vector<16x256xf32>
    %c1_25 = arith.constant 1 : index
    %c0_26 = arith.constant 0 : index
    %c0_27 = arith.constant 0 : index
    %34 = vector.load %arg5[%c1_25, %c0_26, %c0_27] : memref<4x1x256xf32, #tpu.memory_space<vmem>>, vector<1x1x256xf32>
    %35 = vector.shape_cast %34 : vector<1x1x256xf32> to vector<1x256xf32>
    %36 = vector.broadcast %35 : vector<1x256xf32> to vector<16x256xf32>
    %37 = arith.addf %33, %36 : vector<16x256xf32>
    %cst_28 = arith.constant 0.000000e+00 : f32
    %38 = vector.broadcast %cst_28 : f32 to vector<16x256xf32>
    %39 = arith.maximumf %37, %38 : vector<16x256xf32>
    %40 = arith.truncf %39 : vector<16x256xf32> to vector<16x256xbf16>
    %c1_29 = arith.constant 1 : index
    %c0_30 = arith.constant 0 : index
    %c0_31 = arith.constant 0 : index
    %41 = vector.load %arg6[%c1_29, %c0_30, %c0_31] : memref<4x256x256xbf16, #tpu.memory_space<vmem>>, vector<1x256x256xbf16>
    %42 = vector.shape_cast %41 : vector<1x256x256xbf16> to vector<256x256xbf16>
    %cst_32 = arith.constant dense<0.000000e+00> : vector<16x256xf32>
    %43 = tpu.matmul %40, %42, %cst_32 {dimension_numbers = #tpu.dot_dimension_numbers<[1], [0], [0], [1], [0, 0, 1, 1], [], []>} : vector<16x256xbf16>, vector<256x256xbf16>, vector<16x256xf32> -> vector<16x256xf32>
    %c1_33 = arith.constant 1 : index
    %c0_34 = arith.constant 0 : index
    %c0_35 = arith.constant 0 : index
    %44 = vector.load %arg7[%c1_33, %c0_34, %c0_35] : memref<4x1x256xf32, #tpu.memory_space<vmem>>, vector<1x1x256xf32>
    %45 = vector.shape_cast %44 : vector<1x1x256xf32> to vector<1x256xf32>
    %46 = vector.broadcast %45 : vector<1x256xf32> to vector<16x256xf32>
    %47 = arith.addf %43, %46 : vector<16x256xf32>
    %cst_36 = arith.constant 0.000000e+00 : f32
    %48 = vector.broadcast %cst_36 : f32 to vector<16x256xf32>
    %49 = arith.maximumf %47, %48 : vector<16x256xf32>
    %50 = arith.addf %29, %49 : vector<16x256xf32>
    %51 = arith.truncf %50 : vector<16x256xf32> to vector<16x256xbf16>
    %c2 = arith.constant 2 : index
    %c0_37 = arith.constant 0 : index
    %c0_38 = arith.constant 0 : index
    %52 = vector.load %arg4[%c2, %c0_37, %c0_38] : memref<4x256x256xbf16, #tpu.memory_space<vmem>>, vector<1x256x256xbf16>
    %53 = vector.shape_cast %52 : vector<1x256x256xbf16> to vector<256x256xbf16>
    %cst_39 = arith.constant dense<0.000000e+00> : vector<16x256xf32>
    %54 = tpu.matmul %51, %53, %cst_39 {dimension_numbers = #tpu.dot_dimension_numbers<[1], [0], [0], [1], [0, 0, 1, 1], [], []>} : vector<16x256xbf16>, vector<256x256xbf16>, vector<16x256xf32> -> vector<16x256xf32>
    %c2_40 = arith.constant 2 : index
    %c0_41 = arith.constant 0 : index
    %c0_42 = arith.constant 0 : index
    %55 = vector.load %arg5[%c2_40, %c0_41, %c0_42] : memref<4x1x256xf32, #tpu.memory_space<vmem>>, vector<1x1x256xf32>
    %56 = vector.shape_cast %55 : vector<1x1x256xf32> to vector<1x256xf32>
    %57 = vector.broadcast %56 : vector<1x256xf32> to vector<16x256xf32>
    %58 = arith.addf %54, %57 : vector<16x256xf32>
    %cst_43 = arith.constant 0.000000e+00 : f32
    %59 = vector.broadcast %cst_43 : f32 to vector<16x256xf32>
    %60 = arith.maximumf %58, %59 : vector<16x256xf32>
    %61 = arith.truncf %60 : vector<16x256xf32> to vector<16x256xbf16>
    %c2_44 = arith.constant 2 : index
    %c0_45 = arith.constant 0 : index
    %c0_46 = arith.constant 0 : index
    %62 = vector.load %arg6[%c2_44, %c0_45, %c0_46] : memref<4x256x256xbf16, #tpu.memory_space<vmem>>, vector<1x256x256xbf16>
    %63 = vector.shape_cast %62 : vector<1x256x256xbf16> to vector<256x256xbf16>
    %cst_47 = arith.constant dense<0.000000e+00> : vector<16x256xf32>
    %64 = tpu.matmul %61, %63, %cst_47 {dimension_numbers = #tpu.dot_dimension_numbers<[1], [0], [0], [1], [0, 0, 1, 1], [], []>} : vector<16x256xbf16>, vector<256x256xbf16>, vector<16x256xf32> -> vector<16x256xf32>
    %c2_48 = arith.constant 2 : index
    %c0_49 = arith.constant 0 : index
    %c0_50 = arith.constant 0 : index
    %65 = vector.load %arg7[%c2_48, %c0_49, %c0_50] : memref<4x1x256xf32, #tpu.memory_space<vmem>>, vector<1x1x256xf32>
    %66 = vector.shape_cast %65 : vector<1x1x256xf32> to vector<1x256xf32>
    %67 = vector.broadcast %66 : vector<1x256xf32> to vector<16x256xf32>
    %68 = arith.addf %64, %67 : vector<16x256xf32>
    %cst_51 = arith.constant 0.000000e+00 : f32
    %69 = vector.broadcast %cst_51 : f32 to vector<16x256xf32>
    %70 = arith.maximumf %68, %69 : vector<16x256xf32>
    %71 = arith.addf %50, %70 : vector<16x256xf32>
    %72 = arith.truncf %71 : vector<16x256xf32> to vector<16x256xbf16>
    %c3 = arith.constant 3 : index
    %c0_52 = arith.constant 0 : index
    %c0_53 = arith.constant 0 : index
    %73 = vector.load %arg4[%c3, %c0_52, %c0_53] : memref<4x256x256xbf16, #tpu.memory_space<vmem>>, vector<1x256x256xbf16>
    %74 = vector.shape_cast %73 : vector<1x256x256xbf16> to vector<256x256xbf16>
    %cst_54 = arith.constant dense<0.000000e+00> : vector<16x256xf32>
    %75 = tpu.matmul %72, %74, %cst_54 {dimension_numbers = #tpu.dot_dimension_numbers<[1], [0], [0], [1], [0, 0, 1, 1], [], []>} : vector<16x256xbf16>, vector<256x256xbf16>, vector<16x256xf32> -> vector<16x256xf32>
    %c3_55 = arith.constant 3 : index
    %c0_56 = arith.constant 0 : index
    %c0_57 = arith.constant 0 : index
    %76 = vector.load %arg5[%c3_55, %c0_56, %c0_57] : memref<4x1x256xf32, #tpu.memory_space<vmem>>, vector<1x1x256xf32>
    %77 = vector.shape_cast %76 : vector<1x1x256xf32> to vector<1x256xf32>
    %78 = vector.broadcast %77 : vector<1x256xf32> to vector<16x256xf32>
    %79 = arith.addf %75, %78 : vector<16x256xf32>
    %cst_58 = arith.constant 0.000000e+00 : f32
    %80 = vector.broadcast %cst_58 : f32 to vector<16x256xf32>
    %81 = arith.maximumf %79, %80 : vector<16x256xf32>
    %82 = arith.truncf %81 : vector<16x256xf32> to vector<16x256xbf16>
    %c3_59 = arith.constant 3 : index
    %c0_60 = arith.constant 0 : index
    %c0_61 = arith.constant 0 : index
    %83 = vector.load %arg6[%c3_59, %c0_60, %c0_61] : memref<4x256x256xbf16, #tpu.memory_space<vmem>>, vector<1x256x256xbf16>
    %84 = vector.shape_cast %83 : vector<1x256x256xbf16> to vector<256x256xbf16>
    %cst_62 = arith.constant dense<0.000000e+00> : vector<16x256xf32>
    %85 = tpu.matmul %82, %84, %cst_62 {dimension_numbers = #tpu.dot_dimension_numbers<[1], [0], [0], [1], [0, 0, 1, 1], [], []>} : vector<16x256xbf16>, vector<256x256xbf16>, vector<16x256xf32> -> vector<16x256xf32>
    %c3_63 = arith.constant 3 : index
    %c0_64 = arith.constant 0 : index
    %c0_65 = arith.constant 0 : index
    %86 = vector.load %arg7[%c3_63, %c0_64, %c0_65] : memref<4x1x256xf32, #tpu.memory_space<vmem>>, vector<1x1x256xf32>
    %87 = vector.shape_cast %86 : vector<1x1x256xf32> to vector<1x256xf32>
    %88 = vector.broadcast %87 : vector<1x256xf32> to vector<16x256xf32>
    %89 = arith.addf %85, %88 : vector<16x256xf32>
    %cst_66 = arith.constant 0.000000e+00 : f32
    %90 = vector.broadcast %cst_66 : f32 to vector<16x256xf32>
    %91 = arith.maximumf %89, %90 : vector<16x256xf32>
    %92 = arith.addf %71, %91 : vector<16x256xf32>
    %93 = arith.truncf %92 : vector<16x256xf32> to vector<16x256xbf16>
    %c0_67 = arith.constant 0 : index
    %c0_68 = arith.constant 0 : index
    %94 = vector.load %arg8[%c0_67, %c0_68] : memref<256x128xbf16, #tpu.memory_space<vmem>>, vector<256x128xbf16>
    %cst_69 = arith.constant dense<0.000000e+00> : vector<16x128xf32>
    %95 = tpu.matmul %93, %94, %cst_69 {dimension_numbers = #tpu.dot_dimension_numbers<[1], [0], [0], [1], [0, 0, 1, 1], [], []>} : vector<16x256xbf16>, vector<256x128xbf16>, vector<16x128xf32> -> vector<16x128xf32>
    %c0_70 = arith.constant 0 : index
    %c0_71 = arith.constant 0 : index
    %96 = vector.load %arg9[%c0_70, %c0_71] : memref<16x128xf32, #tpu.memory_space<vmem>>, vector<16x128xf32>
    tpu.vector_store %arg9[%c0_70, %c0_71], %95 {strides = array<i32>} : memref<16x128xf32, #tpu.memory_space<vmem>>, vector<16x128xf32>,
    return
  }
  func.func @transform_0(%arg0: i32) -> (i32, i32) {
    %c0_i32 = arith.constant 0 : i32
    %c0_i32_0 = arith.constant 0 : i32
    return %arg0, %c0_i32 : i32, i32
  }
  func.func @transform_1(%arg0: i32) -> (i32, i32) {
    %c0_i32 = arith.constant 0 : i32
    %c0_i32_0 = arith.constant 0 : i32
    %c0_i32_1 = arith.constant 0 : i32
    return %c0_i32, %c0_i32_0 : i32, i32
  }
  func.func @transform_2(%arg0: i32) -> (i32, i32) {
    %c0_i32 = arith.constant 0 : i32
    %c0_i32_0 = arith.constant 0 : i32
    %c0_i32_1 = arith.constant 0 : i32
    return %c0_i32, %c0_i32_0 : i32, i32
  }
  func.func @transform_3(%arg0: i32) -> (i32, i32, i32) {
    %c0_i32 = arith.constant 0 : i32
    %c0_i32_0 = arith.constant 0 : i32
    %c0_i32_1 = arith.constant 0 : i32
    %c0_i32_2 = arith.constant 0 : i32
    return %c0_i32, %c0_i32_0, %c0_i32_1 : i32, i32, i32
  }
  func.func @transform_4(%arg0: i32) -> (i32, i32, i32) {
    %c0_i32 = arith.constant 0 : i32
    %c0_i32_0 = arith.constant 0 : i32
    %c0_i32_1 = arith.constant 0 : i32
    %c0_i32_2 = arith.constant 0 : i32
    return %c0_i32, %c0_i32_0, %c0_i32_1 : i32, i32, i32
  }
  func.func @transform_5(%arg0: i32) -> (i32, i32, i32) {
    %c0_i32 = arith.constant 0 : i32
    %c0_i32_0 = arith.constant 0 : i32
    %c0_i32_1 = arith.constant 0 : i32
    %c0_i32_2 = arith.constant 0 : i32
    return %c0_i32, %c0_i32_0, %c0_i32_1 : i32, i32, i32
  }
  func.func @transform_6(%arg0: i32) -> (i32, i32, i32) {
    %c0_i32 = arith.constant 0 : i32
    %c0_i32_0 = arith.constant 0 : i32
    %c0_i32_1 = arith.constant 0 : i32
    %c0_i32_2 = arith.constant 0 : i32
    return %c0_i32, %c0_i32_0, %c0_i32_1 : i32, i32, i32
  }
  func.func @transform_7(%arg0: i32) -> (i32, i32) {
    %c0_i32 = arith.constant 0 : i32
    %c0_i32_0 = arith.constant 0 : i32
    %c0_i32_1 = arith.constant 0 : i32
    return %c0_i32, %c0_i32_0 : i32, i32
  }
  func.func @transform_8(%arg0: i32) -> (i32, i32) {
    %c0_i32 = arith.constant 0 : i32
    %c0_i32_0 = arith.constant 0 : i32
    return %arg0, %c0_i32 : i32, i32
  }
}

</mosaic_0001>

<llo_original>
// kernel: fcnet_forward.1
$region0: #{fcnet_forward.1}
  #allocation0 [shape = 'u32[]', space=smem, size = 0x4, offset = 0x4, fixed_abs, tag = 'smem constant byte address 0x4 - core index']
  #allocation1 [shape = 'u32[144,128]{1,0:T(1,128)}', space=vmem, size = 0x12000, scoped, tag = 'internal scratch']
  %s0 = inlined_call_operand.vmem [shape: f32[32,128], index: 0, kind: input, shape index: {}]
  %s1 = inlined_call_operand.vmem [shape: bf16[128,256], index: 1, kind: input, shape index: {}]
  %s2 = inlined_call_operand.vmem [shape: f32[1,256], index: 2, kind: input, shape index: {}]
  %s3 = inlined_call_operand.hbm [shape: bf16[4,256,256], index: 3, kind: input, shape index: {}]
  %s4 = inlined_call_operand.hbm [shape: f32[4,1,256], index: 4, kind: input, shape index: {}]
  %s5 = inlined_call_operand.hbm [shape: bf16[4,256,256], index: 5, kind: input, shape index: {}]
  %s6 = inlined_call_operand.hbm [shape: f32[4,1,256], index: 6, kind: input, shape index: {}]
  %s7 = inlined_call_operand.hbm [shape: bf16[256,128], index: 7, kind: input, shape index: {}]
  %s8 = inlined_call_operand.hbm [shape: f32[32,128], index: 8, kind: output, shape index: {}]
  %s9 = sld [smem:[#allocation0]]
  $region85: #{fcnet_forward.1} parent=0
    _
  %s11 = ssub.s32 1, %s9
  %s12 = scalar_select 0, %s11, %s9
  $region1: #{fcnet_forward.1} parent=0
    #allocation2 [shape = 'u8[524288]{0}', space=vmem, size = 0x80000, scoped, tag = 'input window, operand 3, single buffered']
    #allocation3 [shape = 's32[2]{0}', space=sflag, size = 0x8, scoped, tag = 'scoped memory for fcnet_forward.1']
    #allocation4 [shape = 's32[2]{0}', space=sflag, size = 0x8, scoped, tag = 'scoped memory for fcnet_forward.1']
    #allocation5 [shape = 'u8[4096]{0}', space=vmem, size = 0x1000, scoped, tag = 'input window, operand 4, single buffered']
    #allocation6 [shape = 's32[1]{0}', space=sflag, size = 0x4, scoped, tag = 'scoped memory for fcnet_forward.1']
    #allocation7 [shape = 'u8[524288]{0}', space=vmem, size = 0x80000, scoped, tag = 'input window, operand 5, single buffered']
    #allocation8 [shape = 'u8[4096]{0}', space=vmem, size = 0x1000, scoped, tag = 'input window, operand 6, single buffered']
    #allocation9 [shape = 's32[1]{0}', space=sflag, size = 0x4, scoped, tag = 'scoped memory for fcnet_forward.1']
    #allocation10 [shape = 'u8[65536]{0}', space=vmem, size = 0x10000, scoped, tag = 'input window, operand 7, single buffered']
    #allocation11 [shape = 'u8[16384]{0}', space=vmem, size = 0x4000, scoped, tag = 'output window, operand 0']
    %13 = vsyncpa [#allocation3], 0
    %14 = vsyncpa [#allocation6], 0
    %15 = vsyncpa [#allocation9], 0
    %16 = vsyncpa [#allocation4], 0
    %s17 = scalar_lea.sflag [#allocation4], 1
    %18 = vsyncpa %s17, 0
    loop: start=0, step=1, limit=4
    $region2: #{fcnet_forward.1} parent=1 // loop_pre_header
      _
    $region3: #{fcnet_forward.1} parent=1 // loop_header
      %s20 = sphi 0, %s24
      %p21 = scmp.ge.s32.totalorder %s20, 4
      %s30 = sphi 0, %s32
      %s33 = sphi 0, %s30
      %s34 = sphi 0, %s33
      %s50 = sphi 0, %s34
      %s54 = sphi 0, %s54
      %s56 = sphi 0, %s54
      %s57 = sphi 0, %s56
      %s71 = sphi 0, %s57
      %s75 = sphi 0, %s75
      %s77 = sphi 0, %s75
      %s78 = sphi 0, %s77
      %s92 = sphi 0, %s78
      %s96 = sphi 0, %s96
      %s98 = sphi 0, %s96
      %s99 = sphi 0, %s98
      %s113 = sphi 0, %s99
      %s117 = sphi 0, %s117
      %s119 = sphi 0, %s117
      %s120 = sphi 0, %s119
      %s134 = sphi 0, %s120
      %s138 = sphi 0, %s138
      %s140 = sphi 0, %s138
      %s141 = sphi 0, %s140
      %s155 = sphi 0, %s141
      %s159 = sphi 0, %s159
      %s161 = sphi 0, %s159
      %s162 = sphi 0, %s161
      %s176 = sphi 0, %s162
      %s180 = sphi 0, %s180
      %s182 = sphi 0, %s180
      %s183 = sphi 0, %s182
      %s197 = sphi 0, %s183
      %s203 = sphi 0, %s205
      %s206 = sphi 0, %s203
      %s207 = sphi 0, %s206
      %s223 = sphi 0, %s207
    $region4: #{fcnet_forward.1} parent=1 // loop_header_branch
      %23 = sbr.rel (%p21) target = $region8
    $region5: #{fcnet_forward.1} parent=1 // loop_body
      %s25 = ssub.s32 %s20, 1
      %s26 = ssub.s32 %s20, 2
      %s27 = sadd.s32 %s20, 1
      %s28 = ssub.s32 %s20, %s27
      %p29 = scmp.eq.s32.totalorder %s28, 0
      %s31 = sadd.s32 %s30, 1
      %s32 = scalar_select %p29, %s30, %s31
      %p35 = pneg %p29
      %p36 = scmp.eq.s32.totalorder %s20, 1
      %p37 = por %p35, %p36
      %p38 = scmp.ne.s32.totalorder %s30, %s33
      %p39 = scmp.eq.s32.totalorder %s20, 0
      %p40 = por %p38, %p39
      %p41 = scmp.ne.s32.totalorder %s30, %s33
      %p42 = scmp.eq.s32.totalorder %s25, 1
      %p43 = por %p41, %p42
      %p44 = scmp.ne.s32.totalorder %s33, %s34
      %p45 = scmp.eq.s32.totalorder %s25, 0
      %p46 = por %p44, %p45
      %p47 = scmp.ne.s32.totalorder %s33, %s34
      %p48 = scmp.eq.s32.totalorder %s26, 1
      %p49 = por %p47, %p48
      %p51 = scmp.ne.s32.totalorder %s34, %s50
      %p52 = scmp.eq.s32.totalorder %s26, 0
      %p53 = por %p51, %p52
      %s55 = sadd.s32 %s54, 1
      %p58 = scmp.eq.s32.totalorder %s20, 1
      %p59 = scmp.ne.s32.totalorder %s54, %s56
      %p60 = scmp.eq.s32.totalorder %s20, 0
      %p61 = por %p59, %p60
      %p62 = scmp.ne.s32.totalorder %s54, %s56
      %p63 = scmp.eq.s32.totalorder %s25, 1
      %p64 = por %p62, %p63
      %p65 = scmp.ne.s32.totalorder %s56, %s57
      %p66 = scmp.eq.s32.totalorder %s25, 0
      %p67 = por %p65, %p66
      %p68 = scmp.ne.s32.totalorder %s56, %s57
      %p69 = scmp.eq.s32.totalorder %s26, 1
      %p70 = por %p68, %p69
      %p72 = scmp.ne.s32.totalorder %s57, %s71
      %p73 = scmp.eq.s32.totalorder %s26, 0
      %p74 = por %p72, %p73
      %s76 = sadd.s32 %s75, 1
      %p79 = scmp.eq.s32.totalorder %s20, 1
      %p80 = scmp.ne.s32.totalorder %s75, %s77
      %p81 = scmp.eq.s32.totalorder %s20, 0
      %p82 = por %p80, %p81
      %p83 = scmp.ne.s32.totalorder %s75, %s77
      %p84 = scmp.eq.s32.totalorder %s25, 1
      %p85 = por %p83, %p84
      %p86 = scmp.ne.s32.totalorder %s77, %s78
      %p87 = scmp.eq.s32.totalorder %s25, 0
      %p88 = por %p86, %p87
      %p89 = scmp.ne.s32.totalorder %s77, %s78
      %p90 = scmp.eq.s32.totalorder %s26, 1
      %p91 = por %p89, %p90
      %p93 = scmp.ne.s32.totalorder %s78, %s92
      %p94 = scmp.eq.s32.totalorder %s26, 0
      %p95 = por %p93, %p94
      %s97 = sadd.s32 %s96, 1
      %p100 = scmp.eq.s32.totalorder %s20, 1
      %p101 = scmp.ne.s32.totalorder %s96, %s98
      %p102 = scmp.eq.s32.totalorder %s20, 0
      %p103 = por %p101, %p102
      %p104 = scmp.ne.s32.totalorder %s96, %s98
      %p105 = scmp.eq.s32.totalorder %s25, 1
      %p106 = por %p104, %p105
      %p107 = scmp.ne.s32.totalorder %s98, %s99
      %p108 = scmp.eq.s32.totalorder %s25, 0
      %p109 = por %p107, %p108
      %p110 = scmp.ne.s32.totalorder %s98, %s99
      %p111 = scmp.eq.s32.totalorder %s26, 1
      %p112 = por %p110, %p111
      %p114 = scmp.ne.s32.totalorder %s99, %s113
      %p115 = scmp.eq.s32.totalorder %s26, 0
      %p116 = por %p114, %p115
      %s118 = sadd.s32 %s117, 1
      %p121 = scmp.eq.s32.totalorder %s20, 1
      %p122 = scmp.ne.s32.totalorder %s117, %s119
      %p123 = scmp.eq.s32.totalorder %s20, 0
      %p124 = por %p122, %p123
      %p125 = scmp.ne.s32.totalorder %s117, %s119
      %p126 = scmp.eq.s32.totalorder %s25, 1
      %p127 = por %p125, %p126
      %p128 = scmp.ne.s32.totalorder %s119, %s120
      %p129 = scmp.eq.s32.totalorder %s25, 0
      %p130 = por %p128, %p129
      %p131 = scmp.ne.s32.totalorder %s119, %s120
      %p132 = scmp.eq.s32.totalorder %s26, 1
      %p133 = por %p131, %p132
      %p135 = scmp.ne.s32.totalorder %s120, %s134
      %p136 = scmp.eq.s32.totalorder %s26, 0
      %p137 = por %p135, %p136
      %s139 = sadd.s32 %s138, 1
      %p142 = scmp.eq.s32.totalorder %s20, 1
      %p143 = scmp.ne.s32.totalorder %s138, %s140
      %p144 = scmp.eq.s32.totalorder %s20, 0
      %p145 = por %p143, %p144
      %p146 = scmp.ne.s32.totalorder %s138, %s140
      %p147 = scmp.eq.s32.totalorder %s25, 1
      %p148 = por %p146, %p147
      %p149 = scmp.ne.s32.totalorder %s140, %s141
      %p150 = scmp.eq.s32.totalorder %s25, 0
      %p151 = por %p149, %p150
      %p152 = scmp.ne.s32.totalorder %s140, %s141
      %p153 = scmp.eq.s32.totalorder %s26, 1
      %p154 = por %p152, %p153
      %p156 = scmp.ne.s32.totalorder %s141, %s155
      %p157 = scmp.eq.s32.totalorder %s26, 0
      %p158 = por %p156, %p157
      %s160 = sadd.s32 %s159, 1
      %p163 = scmp.eq.s32.totalorder %s20, 1
      %p164 = scmp.ne.s32.totalorder %s159, %s161
      %p165 = scmp.eq.s32.totalorder %s20, 0
      %p166 = por %p164, %p165
      %p167 = scmp.ne.s32.totalorder %s159, %s161
      %p168 = scmp.eq.s32.totalorder %s25, 1
      %p169 = por %p167, %p168
      %p170 = scmp.ne.s32.totalorder %s161, %s162
      %p171 = scmp.eq.s32.totalorder %s25, 0
      %p172 = por %p170, %p171
      %p173 = scmp.ne.s32.totalorder %s161, %s162
      %p174 = scmp.eq.s32.totalorder %s26, 1
      %p175 = por %p173, %p174
      %p177 = scmp.ne.s32.totalorder %s162, %s176
      %p178 = scmp.eq.s32.totalorder %s26, 0
      %p179 = por %p177, %p178
      %s181 = sadd.s32 %s180, 1
      %p184 = scmp.eq.s32.totalorder %s20, 1
      %p185 = scmp.ne.s32.totalorder %s180, %s182
      %p186 = scmp.eq.s32.totalorder %s20, 0
      %p187 = por %p185, %p186
      %p188 = scmp.ne.s32.totalorder %s180, %s182
      %p189 = scmp.eq.s32.totalorder %s25, 1
      %p190 = por %p188, %p189
      %p191 = scmp.ne.s32.totalorder %s182, %s183
      %p192 = scmp.eq.s32.totalorder %s25, 0
      %p193 = por %p191, %p192
      %p194 = scmp.ne.s32.totalorder %s182, %s183
      %p195 = scmp.eq.s32.totalorder %s26, 1
      %p196 = por %p194, %p195
      %p198 = scmp.ne.s32.totalorder %s183, %s197
      %p199 = scmp.eq.s32.totalorder %s26, 0
      %p200 = por %p198, %p199
      %s201 = ssub.s32 %s20, %s27
      %p202 = scmp.eq.s32.totalorder %s201, 0
      %s204 = sadd.s32 %s203, 1
      %s205 = scalar_select %p202, %s203, %s204
      %p208 = pneg %p202
      %p209 = scmp.eq.s32.totalorder %s20, 1
      %p210 = por %p208, %p209
      %p211 = scmp.ne.s32.totalorder %s203, %s206
      %p212 = scmp.eq.s32.totalorder %s20, 0
      %p213 = por %p211, %p212
      %p214 = scmp.ne.s32.totalorder %s203, %s206
      %p215 = scmp.eq.s32.totalorder %s25, 1
      %p216 = por %p214, %p215
      %p217 = scmp.ne.s32.totalorder %s206, %s207
      %p218 = scmp.eq.s32.totalorder %s25, 0
      %p219 = por %p217, %p218
      %p220 = scmp.ne.s32.totalorder %s206, %s207
      %p221 = scmp.eq.s32.totalorder %s26, 1
      %p222 = por %p220, %p221
      %p224 = scmp.ne.s32.totalorder %s207, %s223
      %p225 = scmp.eq.s32.totalorder %s26, 0
      %p226 = por %p224, %p225
      %p227 = scmp.le.s32.totalorder 1, %s20
      %p228 = scmp.lt.s32.totalorder %s20, 3
      %p229 = pnand %p227, %p228
      %p230 = pneg %p229
      // Predicated region
      $region9: #{fcnet_forward.1} parent=5 // pred_check
        _
      $region10: #{fcnet_forward.1} parent=5 // pred_check_branch
        %232 = sbr.rel (%p229) target = $region12
      $region11: #{fcnet_forward.1} parent=5 // pred_region
        %s233 = ssub.s32 %s20, 1
        // Predicated region
        $region13: #{fcnet_forward.1} parent=11 // pred_check
          %p234 = pneg %p67
        $region14: #{fcnet_forward.1} parent=11 // pred_check_branch
          %236 = sbr.rel (%p234) target = $region16
        $region15: #{fcnet_forward.1} parent=11 // pred_region
          _
        $region16: #{fcnet_forward.1} parent=11 // pred_fallthru
          _
        // Predicated region
        $region17: #{fcnet_forward.1} parent=11 // pred_check
          %p237 = pneg %p88
        $region18: #{fcnet_forward.1} parent=11 // pred_check_branch
          %239 = sbr.rel (%p237) target = $region20
        $region19: #{fcnet_forward.1} parent=11 // pred_region
          _
        $region20: #{fcnet_forward.1} parent=11 // pred_fallthru
          _
        // Predicated region
        $region21: #{fcnet_forward.1} parent=11 // pred_check
          %p240 = pneg %p109
        $region22: #{fcnet_forward.1} parent=11 // pred_check_branch
          %242 = sbr.rel (%p240) target = $region24
        $region23: #{fcnet_forward.1} parent=11 // pred_region
          %s244 = ssub.s32 16384, 16384
          %245 = vsyncadd [#allocation3], %s244
          %s246 = sshll.u32 [#allocation2], 4
          %s247 = int_to_ptr.vmem [resolvable:$true] %s246
          %252 = dma.hbm_to_vmem [thread:$0]  %s3, 16384, %s247, [#allocation3], 128, 128, 8
        $region24: #{fcnet_forward.1} parent=11 // pred_fallthru
          _
        // Predicated region
        $region25: #{fcnet_forward.1} parent=11 // pred_check
          %p253 = pneg %p130
        $region26: #{fcnet_forward.1} parent=11 // pred_check_branch
          %255 = sbr.rel (%p253) target = $region28
        $region27: #{fcnet_forward.1} parent=11 // pred_region
          %s257 = ssub.s32 128, 128
          %258 = vsyncadd [#allocation6], %s257
          %s259 = sshll.u32 [#allocation5], 4
          %s260 = int_to_ptr.vmem [resolvable:$true] %s259
          %265 = dma.hbm_to_vmem [thread:$0]  %s4, 128, %s260, [#allocation6], 32, 32, 2
        $region28: #{fcnet_forward.1} parent=11 // pred_fallthru
          _
        // Predicated region
        $region29: #{fcnet_forward.1} parent=11 // pred_check
          %p266 = pneg %p151
        $region30: #{fcnet_forward.1} parent=11 // pred_check_branch
          %268 = sbr.rel (%p266) target = $region32
        $region31: #{fcnet_forward.1} parent=11 // pred_region
          %s270 = ssub.s32 16384, 16384
          %271 = vsyncadd [#allocation6], %s270
          %s272 = sshll.u32 [#allocation7], 4
          %s273 = int_to_ptr.vmem [resolvable:$true] %s272
          %278 = dma.hbm_to_vmem [thread:$0]  %s5, 16384, %s273, [#allocation6], 128, 128, 8
        $region32: #{fcnet_forward.1} parent=11 // pred_fallthru
          _
        // Predicated region
        $region33: #{fcnet_forward.1} parent=11 // pred_check
          %p279 = pneg %p172
        $region34: #{fcnet_forward.1} parent=11 // pred_check_branch
          %281 = sbr.rel (%p279) target = $region36
        $region35: #{fcnet_forward.1} parent=11 // pred_region
          %s283 = ssub.s32 128, 128
          %284 = vsyncadd [#allocation9], %s283
          %s285 = sshll.u32 [#allocation8], 4
          %s286 = int_to_ptr.vmem [resolvable:$true] %s285
          %291 = dma.hbm_to_vmem [thread:$0]  %s6, 128, %s286, [#allocation9], 32, 32, 2
        $region36: #{fcnet_forward.1} parent=11 // pred_fallthru
          _
        // Predicated region
        $region37: #{fcnet_forward.1} parent=11 // pred_check
          %p292 = pneg %p193
        $region38: #{fcnet_forward.1} parent=11 // pred_check_branch
          %294 = sbr.rel (%p292) target = $region40
        $region39: #{fcnet_forward.1} parent=11 // pred_region
          %s296 = ssub.s32 2048, 2048
          %297 = vsyncadd [#allocation9], %s296
          %s298 = sshll.u32 [#allocation10], 4
          %s299 = int_to_ptr.vmem [resolvable:$true] %s298
          %304 = dma.hbm_to_vmem [thread:$0]  %s7, 2048, %s299, [#allocation9], 64, 64, 4
        $region40: #{fcnet_forward.1} parent=11 // pred_fallthru
          _
      $region12: #{fcnet_forward.1} parent=5 // pred_fallthru
        _
      %p305 = scmp.lt.s32.totalorder %s20, 2
      // Predicated region
      $region41: #{fcnet_forward.1} parent=5 // pred_check
        %p306 = pneg %p305
      $region42: #{fcnet_forward.1} parent=5 // pred_check_branch
        %308 = sbr.rel (%p306) target = $region44
      $region43: #{fcnet_forward.1} parent=5 // pred_region
        // Predicated region
        $region45: #{fcnet_forward.1} parent=43 // pred_check
          %p309 = pneg %p40
        $region46: #{fcnet_forward.1} parent=43 // pred_check_branch
          %311 = sbr.rel (%p309) target = $region48
        $region47: #{fcnet_forward.1} parent=43 // pred_region
          %s312 = smul.u32 2, %s20
          %p313 = scmp.lt.s32.totalorder %s312, 3
          %s314 = scalar_select %p313, %s312, 3
          %s315 = smul.addr %s314, 8
          %s316 = scalar_lea.vmem %s0, %s315
          %s317 = smul.u32 2, %s20
        $region48: #{fcnet_forward.1} parent=43 // pred_fallthru
          _
      $region44: #{fcnet_forward.1} parent=5 // pred_fallthru
        _
      %p318 = scmp.le.s32.totalorder 1, %s20
      %p319 = scmp.lt.s32.totalorder %s20, 3
      %p320 = pnand %p318, %p319
      %p321 = pneg %p320
      // Predicated region
      $region49: #{fcnet_forward.1} parent=5 // pred_check
        _
      $region50: #{fcnet_forward.1} parent=5 // pred_check_branch
        %323 = sbr.rel (%p320) target = $region52
      $region51: #{fcnet_forward.1} parent=5 // pred_region
        %s324 = ssub.s32 %s20, 1
        // Predicated region
        $region53: #{fcnet_forward.1} parent=51 // pred_check
          %p325 = pneg %p109
        $region54: #{fcnet_forward.1} parent=51 // pred_check_branch
          %327 = sbr.rel (%p325) target = $region56
        $region55: #{fcnet_forward.1} parent=51 // pred_region
          %328 = dma.done [#allocation3], 16384
        $region56: #{fcnet_forward.1} parent=51 // pred_fallthru
          _
        // Predicated region
        $region57: #{fcnet_forward.1} parent=51 // pred_check
          %p329 = pneg %p130
        $region58: #{fcnet_forward.1} parent=51 // pred_check_branch
          %331 = sbr.rel (%p329) target = $region60
        $region59: #{fcnet_forward.1} parent=51 // pred_region
          %332 = dma.done [#allocation6], 128
        $region60: #{fcnet_forward.1} parent=51 // pred_fallthru
          _
        // Predicated region
        $region61: #{fcnet_forward.1} parent=51 // pred_check
          %p333 = pneg %p151
        $region62: #{fcnet_forward.1} parent=51 // pred_check_branch
          %335 = sbr.rel (%p333) target = $region64
        $region63: #{fcnet_forward.1} parent=51 // pred_region
          %336 = dma.done [#allocation6], 16384
        $region64: #{fcnet_forward.1} parent=51 // pred_fallthru
          _
        // Predicated region
        $region65: #{fcnet_forward.1} parent=51 // pred_check
          %p337 = pneg %p172
        $region66: #{fcnet_forward.1} parent=51 // pred_check_branch
          %339 = sbr.rel (%p337) target = $region68
        $region67: #{fcnet_forward.1} parent=51 // pred_region
          %340 = dma.done [#allocation9], 128
        $region68: #{fcnet_forward.1} parent=51 // pred_fallthru
          _
        // Predicated region
        $region69: #{fcnet_forward.1} parent=51 // pred_check
          %p341 = pneg %p193
        $region70: #{fcnet_forward.1} parent=51 // pred_check_branch
          %343 = sbr.rel (%p341) target = $region72
        $region71: #{fcnet_forward.1} parent=51 // pred_region
          %344 = dma.done [#allocation9], 2048
        $region72: #{fcnet_forward.1} parent=51 // pred_fallthru
          _
        %s345 = smul.u32 2, %s25
        %p346 = scmp.lt.s32.totalorder %s345, 3
        %s347 = scalar_select %p346, %s345, 3
        %s348 = smul.addr %s347, 8
        %s349 = scalar_lea.vmem %s0, %s348
        %p350 = pneg %p46
        %p351 = pneg %p43
        %p352 = pneg %p67
        %p353 = pneg %p64
        %p354 = pneg %p88
        %p355 = pneg %p85
        %p356 = pneg %p109
        %p357 = pneg %p106
        %p358 = pneg %p130
        %p359 = pneg %p127
        %p360 = pneg %p151
        %p361 = pneg %p148
        %p362 = pneg %p172
        %p363 = pneg %p169
        %p364 = pneg %p193
        %p365 = pneg %p190
        %p366 = pneg %p219
        %p367 = pneg %p216
        %s368 = sand.u32 %s206, 1
        %s369 = scalar_lea.sflag [#allocation4], %s368
        %s370 = sand.u32 %s206, 1
        %s371 = smul.addr %s370, 16
        %s372 = scalar_lea.vmem [#allocation11], %s371
        %s373 = smul.u32 2, %s25
        %p374 = scmp.lt.s32.totalorder %s373, 3
        %s375 = scalar_select %p374, %s373, 3
        %s376 = smul.addr %s375, 8
        %s377 = scalar_lea.vmem %s0, %s376
        %s378 = smul.u32 2, %s25
        %s379 = smul.u32 2, %s25
        %v381 = vld [vmem:[%s377] sm:$0xff]
        %v382 = vld [vmem:[%s377 + $0x8] sm:$0xff]
        %v383 = vpack.c.bf16 %v382, %v381
        %v384 = vld [vmem:[%s1] sm:$0xff]
        %v385 = vld [vmem:[%s1 + $0x8] sm:$0xff]
        %v386 = vld [vmem:[%s1 + $0x10] sm:$0xff]
        %v387 = vld [vmem:[%s1 + $0x18] sm:$0xff]
        %v388 = vld [vmem:[%s1 + $0x20] sm:$0xff]
        %v389 = vld [vmem:[%s1 + $0x28] sm:$0xff]
        %v390 = vld [vmem:[%s1 + $0x30] sm:$0xff]
        %v391 = vld [vmem:[%s1 + $0x38] sm:$0xff]
        %v392 = vld [vmem:[%s1 + $0x40] sm:$0xff]
        %v393 = vld [vmem:[%s1 + $0x48] sm:$0xff]
        %v394 = vld [vmem:[%s1 + $0x50] sm:$0xff]
        %v395 = vld [vmem:[%s1 + $0x58] sm:$0xff]
        %v396 = vld [vmem:[%s1 + $0x60] sm:$0xff]
        %v397 = vld [vmem:[%s1 + $0x68] sm:$0xff]
        %v398 = vld [vmem:[%s1 + $0x70] sm:$0xff]
        %v399 = vld [vmem:[%s1 + $0x78] sm:$0xff]
        %v400 = vld [vmem:[%s2] sm:$0x3]
        %v402 = vlaneseq
        %v403 = vshrl.u32 %v402, 7
        %v404 = vsub.s32 0, %v403
        %v405 = vrot.slane %v400, %v404
        %v406 = vlaneseq
        %v407 = vshrl.u32 %v406, 7
        %v408 = vsub.s32 1, %v407
        %v409 = vrot.slane %v400, %v408
        %v428 = vunpack.c.l.b16 %v384
        %v429 = vunpack.c.h.b16 %v384
        %v430 = vunpack.c.l.b16 %v385
        %v431 = vunpack.c.h.b16 %v385
        %v432 = vunpack.c.l.b16 %v386
        %v433 = vunpack.c.h.b16 %v386
        %v434 = vunpack.c.l.b16 %v387
        %v435 = vunpack.c.h.b16 %v387
        %v436 = vunpack.c.l.b16 %v388
        %v437 = vunpack.c.h.b16 %v388
        %v438 = vunpack.c.l.b16 %v389
        %v439 = vunpack.c.h.b16 %v389
        %v440 = vunpack.c.l.b16 %v390
        %v441 = vunpack.c.h.b16 %v390
        %v442 = vunpack.c.l.b16 %v391
        %v443 = vunpack.c.h.b16 %v391
        %v444 = vunpack.c.l.b16 %v392
        %v445 = vunpack.c.h.b16 %v392
        %v446 = vunpack.c.l.b16 %v393
        %v447 = vunpack.c.h.b16 %v393
        %v448 = vunpack.c.l.b16 %v394
        %v449 = vunpack.c.h.b16 %v394
        %v450 = vunpack.c.l.b16 %v395
        %v451 = vunpack.c.h.b16 %v395
        %v452 = vunpack.c.l.b16 %v396
        %v453 = vunpack.c.h.b16 %v396
        %v454 = vunpack.c.l.b16 %v397
        %v455 = vunpack.c.h.b16 %v397
        %v456 = vunpack.c.l.b16 %v398
        %v457 = vunpack.c.h.b16 %v398
        %v458 = vunpack.c.l.b16 %v399
        %v459 = vunpack.c.h.b16 %v399
        %v460 = vpack.c.b16 %v430, %v428
        %v461 = vpack.c.b16 %v431, %v429
        %v462 = vpack.c.b16 %v434, %v432
        %v463 = vpack.c.b16 %v435, %v433
        %v464 = vpack.c.b16 %v438, %v436
        %v465 = vpack.c.b16 %v439, %v437
        %v466 = vpack.c.b16 %v442, %v440
        %v467 = vpack.c.b16 %v443, %v441
        %v468 = vpack.c.b16 %v446, %v444
        %v469 = vpack.c.b16 %v447, %v445
        %v470 = vpack.c.b16 %v450, %v448
        %v471 = vpack.c.b16 %v451, %v449
        %v472 = vpack.c.b16 %v454, %v452
        %v473 = vpack.c.b16 %v455, %v453
        %v474 = vpack.c.b16 %v458, %v456
        %v475 = vpack.c.b16 %v459, %v457
        %492 = vmatprep.subr.bf16.mxu0 %v461
        %493 = vmatpush1.bf16.msra.mxu0 %v460
        %494 = vmatprep.subr.bf16.mxu0 %v463
        %495 = vmatpush1.bf16.msra.mxu0 %v462
        %496 = vmatprep.subr.bf16.mxu0 %v465
        %497 = vmatpush1.bf16.msra.mxu0 %v464
        %498 = vmatprep.subr.bf16.mxu0 %v467
        %499 = vmatpush1.bf16.msra.mxu0 %v466
        %500 = vmatprep.subr.bf16.mxu0 %v469
        %501 = vmatpush1.bf16.msra.mxu0 %v468
        %502 = vmatprep.subr.bf16.mxu0 %v471
        %503 = vmatpush1.bf16.msra.mxu0 %v470
        %504 = vmatprep.subr.bf16.mxu0 %v473
        %505 = vmatpush1.bf16.msra.mxu0 %v472
        %506 = vmatprep.subr.bf16.mxu0 %v475
        %507 = vmatpush1.bf16.msra.mxu0 %v474
        %508 = vmatprep.subr.bf16.mxu0 0
        %509 = vmatpush1.bf16.msra.mxu0 0
        %510 = vmatprep.subr.bf16.mxu0 0
        %511 = vmatpush1.bf16.msra.mxu0 0
        %512 = vmatprep.subr.bf16.mxu0 0
        %513 = vmatpush1.bf16.msra.mxu0 0
        %514 = vmatprep.subr.bf16.mxu0 0
        %515 = vmatpush1.bf16.msra.mxu0 0
        %516 = vmatprep.subr.bf16.mxu0 0
        %517 = vmatpush1.bf16.msra.mxu0 0
        %518 = vmatprep.subr.bf16.mxu0 0
        %519 = vmatpush1.bf16.msra.mxu0 0
        %520 = vmatprep.subr.bf16.mxu0 0
        %521 = vmatpush1.bf16.msra.mxu0 0
        %522 = vmatprep.subr.bf16.mxu0 0
        %523 = vmatpush1.bf16.msra.mxu0 0
        %524 = vmatprep.mubr.bf16.mxu0 0
        %525 = vmatmul.mubr.bf16.gmra.mrb[0].mxu0 %v383
        %v526 = vpop.f32.mrb[0].mxu0
        %v527 = vadd.f32 %v405, %v526
        %v528 = vpop.f32.mrb[0].mxu0
        %v529 = vadd.f32 %v409, %v528
        %v530 = vpop.f32.mrb[0].mxu0
        %v531 = vadd.f32 %v405, %v530
        %v532 = vpop.f32.mrb[0].mxu0
        %v533 = vadd.f32 %v409, %v532
        %534 = vdwg.mxu0
        %v535 = vmax.f32 %v527, 0.0
        %v536 = vmax.f32 %v529, 0.0
        %v537 = vmax.f32 %v531, 0.0
        %v538 = vmax.f32 %v533, 0.0
        %v539 = vpack.c.bf16 %v537, %v535
        %v540 = vpack.c.bf16 %v538, %v536
        %v541 = vld [vmem:[#allocation2] sm:$0xff]
        %v542 = vld [vmem:[#allocation2 + $0x8] sm:$0xff]
        %v543 = vld [vmem:[#allocation2 + $0x10] sm:$0xff]
        %v544 = vld [vmem:[#allocation2 + $0x18] sm:$0xff]
        %v545 = vld [vmem:[#allocation2 + $0x20] sm:$0xff]
        %v546 = vld [vmem:[#allocation2 + $0x28] sm:$0xff]
        %v547 = vld [vmem:[#allocation2 + $0x30] sm:$0xff]
        %v548 = vld [vmem:[#allocation2 + $0x38] sm:$0xff]
        %v549 = vld [vmem:[#allocation2 + $0x40] sm:$0xff]
        %v550 = vld [vmem:[#allocation2 + $0x48] sm:$0xff]
        %v551 = vld [vmem:[#allocation2 + $0x50] sm:$0xff]
        %v552 = vld [vmem:[#allocation2 + $0x58] sm:$0xff]
        %v553 = vld [vmem:[#allocation2 + $0x60] sm:$0xff]
        %v554 = vld [vmem:[#allocation2 + $0x68] sm:$0xff]
        %v555 = vld [vmem:[#allocation2 + $0x70] sm:$0xff]
        %v556 = vld [vmem:[#allocation2 + $0x78] sm:$0xff]
        %v557 = vld [vmem:[#allocation2 + $0x80] sm:$0xff]
        %v558 = vld [vmem:[#allocation2 + $0x88] sm:$0xff]
        %v559 = vld [vmem:[#allocation2 + $0x90] sm:$0xff]
        %v560 = vld [vmem:[#allocation2 + $0x98] sm:$0xff]
        %v561 = vld [vmem:[#allocation2 + $0xa0] sm:$0xff]
        %v562 = vld [vmem:[#allocation2 + $0xa8] sm:$0xff]
        %v563 = vld [vmem:[#allocation2 + $0xb0] sm:$0xff]
        %v564 = vld [vmem:[#allocation2 + $0xb8] sm:$0xff]
        %v565 = vld [vmem:[#allocation2 + $0xc0] sm:$0xff]
        %v566 = vld [vmem:[#allocation2 + $0xc8] sm:$0xff]
        %v567 = vld [vmem:[#allocation2 + $0xd0] sm:$0xff]
        %v568 = vld [vmem:[#allocation2 + $0xd8] sm:$0xff]
        %v569 = vld [vmem:[#allocation2 + $0xe0] sm:$0xff]
        %v570 = vld [vmem:[#allocation2 + $0xe8] sm:$0xff]
        %v571 = vld [vmem:[#allocation2 + $0xf0] sm:$0xff]
        %v572 = vld [vmem:[#allocation2 + $0xf8] sm:$0xff]
        %v573 = vld [vmem:[#allocation5] sm:$0x3]
        %v575 = vlaneseq
        %v576 = vshrl.u32 %v575, 7
        %v577 = vsub.s32 0, %v576
        %v578 = vrot.slane %v573, %v577
        %v579 = vlaneseq
        %v580 = vshrl.u32 %v579, 7
        %v581 = vsub.s32 1, %v580
        %v582 = vrot.slane %v573, %v581
        %v617 = vunpack.c.l.b16 %v541
        %v618 = vunpack.c.h.b16 %v541
        %v619 = vunpack.c.l.b16 %v542
        %v620 = vunpack.c.h.b16 %v542
        %v621 = vunpack.c.l.b16 %v543
        %v622 = vunpack.c.h.b16 %v543
        %v623 = vunpack.c.l.b16 %v544
        %v624 = vunpack.c.h.b16 %v544
        %v625 = vunpack.c.l.b16 %v545
        %v626 = vunpack.c.h.b16 %v545
        %v627 = vunpack.c.l.b16 %v546
        %v628 = vunpack.c.h.b16 %v546
        %v629 = vunpack.c.l.b16 %v547
        %v630 = vunpack.c.h.b16 %v547
        %v631 = vunpack.c.l.b16 %v548
        %v632 = vunpack.c.h.b16 %v548
        %v633 = vunpack.c.l.b16 %v549
        %v634 = vunpack.c.h.b16 %v549
        %v635 = vunpack.c.l.b16 %v550
        %v636 = vunpack.c.h.b16 %v550
        %v637 = vunpack.c.l.b16 %v551
        %v638 = vunpack.c.h.b16 %v551
        %v639 = vunpack.c.l.b16 %v552
        %v640 = vunpack.c.h.b16 %v552
        %v641 = vunpack.c.l.b16 %v553
        %v642 = vunpack.c.h.b16 %v553
        %v643 = vunpack.c.l.b16 %v554
        %v644 = vunpack.c.h.b16 %v554
        %v645 = vunpack.c.l.b16 %v555
        %v646 = vunpack.c.h.b16 %v555
        %v647 = vunpack.c.l.b16 %v556
        %v648 = vunpack.c.h.b16 %v556
        %v649 = vunpack.c.l.b16 %v557
        %v650 = vunpack.c.h.b16 %v557
        %v651 = vunpack.c.l.b16 %v558
        %v652 = vunpack.c.h.b16 %v558
        %v653 = vunpack.c.l.b16 %v559
        %v654 = vunpack.c.h.b16 %v559
        %v655 = vunpack.c.l.b16 %v560
        %v656 = vunpack.c.h.b16 %v560
        %v657 = vunpack.c.l.b16 %v561
        %v658 = vunpack.c.h.b16 %v561
        %v659 = vunpack.c.l.b16 %v562
        %v660 = vunpack.c.h.b16 %v562
        %v661 = vunpack.c.l.b16 %v563
        %v662 = vunpack.c.h.b16 %v563
        %v663 = vunpack.c.l.b16 %v564
        %v664 = vunpack.c.h.b16 %v564
        %v665 = vunpack.c.l.b16 %v565
        %v666 = vunpack.c.h.b16 %v565
        %v667 = vunpack.c.l.b16 %v566
        %v668 = vunpack.c.h.b16 %v566
        %v669 = vunpack.c.l.b16 %v567
        %v670 = vunpack.c.h.b16 %v567
        %v671 = vunpack.c.l.b16 %v568
        %v672 = vunpack.c.h.b16 %v568
        %v673 = vunpack.c.l.b16 %v569
        %v674 = vunpack.c.h.b16 %v569
        %v675 = vunpack.c.l.b16 %v570
        %v676 = vunpack.c.h.b16 %v570
        %v677 = vunpack.c.l.b16 %v571
        %v678 = vunpack.c.h.b16 %v571
        %v679 = vunpack.c.l.b16 %v572
        %v680 = vunpack.c.h.b16 %v572
        %v681 = vpack.c.b16 %v619, %v617
        %v682 = vpack.c.b16 %v620, %v618
        %v683 = vpack.c.b16 %v623, %v621
        %v684 = vpack.c.b16 %v624, %v622
        %v685 = vpack.c.b16 %v627, %v625
        %v686 = vpack.c.b16 %v628, %v626
        %v687 = vpack.c.b16 %v631, %v629
        %v688 = vpack.c.b16 %v632, %v630
        %v689 = vpack.c.b16 %v635, %v633
        %v690 = vpack.c.b16 %v636, %v634
        %v691 = vpack.c.b16 %v639, %v637
        %v692 = vpack.c.b16 %v640, %v638
        %v693 = vpack.c.b16 %v643, %v641
        %v694 = vpack.c.b16 %v644, %v642
        %v695 = vpack.c.b16 %v647, %v645
        %v696 = vpack.c.b16 %v648, %v646
        %v697 = vpack.c.b16 %v651, %v649
        %v698 = vpack.c.b16 %v652, %v650
        %v699 = vpack.c.b16 %v655, %v653
        %v700 = vpack.c.b16 %v656, %v654
        %v701 = vpack.c.b16 %v659, %v657
        %v702 = vpack.c.b16 %v660, %v658
        %v703 = vpack.c.b16 %v663, %v661
        %v704 = vpack.c.b16 %v664, %v662
        %v705 = vpack.c.b16 %v667, %v665
        %v706 = vpack.c.b16 %v668, %v666
        %v707 = vpack.c.b16 %v671, %v669
        %v708 = vpack.c.b16 %v672, %v670
        %v709 = vpack.c.b16 %v675, %v673
        %v710 = vpack.c.b16 %v676, %v674
        %v711 = vpack.c.b16 %v679, %v677
        %v712 = vpack.c.b16 %v680, %v678
        %745 = vmatprep.subr.bf16.mxu0 %v682
        %746 = vmatpush1.bf16.msra.mxu0 %v681
        %747 = vmatprep.subr.bf16.mxu0 %v684
        %748 = vmatpush1.bf16.msra.mxu0 %v683
        %749 = vmatprep.subr.bf16.mxu0 %v686
        %750 = vmatpush1.bf16.msra.mxu0 %v685
        %751 = vmatprep.subr.bf16.mxu0 %v688
        %752 = vmatpush1.bf16.msra.mxu0 %v687
        %753 = vmatprep.subr.bf16.mxu0 %v690
        %754 = vmatpush1.bf16.msra.mxu0 %v689
        %755 = vmatprep.subr.bf16.mxu0 %v692
        %756 = vmatpush1.bf16.msra.mxu0 %v691
        %757 = vmatprep.subr.bf16.mxu0 %v694
        %758 = vmatpush1.bf16.msra.mxu0 %v693
        %759 = vmatprep.subr.bf16.mxu0 %v696
        %760 = vmatpush1.bf16.msra.mxu0 %v695
        %761 = vmatprep.subr.bf16.mxu0 %v698
        %762 = vmatpush1.bf16.msra.mxu0 %v697
        %763 = vmatprep.subr.bf16.mxu0 %v700
        %764 = vmatpush1.bf16.msra.mxu0 %v699
        %765 = vmatprep.subr.bf16.mxu0 %v702
        %766 = vmatpush1.bf16.msra.mxu0 %v701
        %767 = vmatprep.subr.bf16.mxu0 %v704
        %768 = vmatpush1.bf16.msra.mxu0 %v703
        %769 = vmatprep.subr.bf16.mxu0 %v706
        %770 = vmatpush1.bf16.msra.mxu0 %v705
        %771 = vmatprep.subr.bf16.mxu0 %v708
        %772 = vmatpush1.bf16.msra.mxu0 %v707
        %773 = vmatprep.subr.bf16.mxu0 %v710
        %774 = vmatpush1.bf16.msra.mxu0 %v709
        %775 = vmatprep.subr.bf16.mxu0 %v712
        %776 = vmatpush1.bf16.msra.mxu0 %v711
        %777 = vmatprep.mubr.bf16.mxu0 %v540
        %778 = vmatmul.mubr.bf16.gmra.mrb[0].mxu0 %v539
        %v779 = vpop.f32.mrb[0].mxu0
        %v780 = vadd.f32 %v578, %v779
        %v781 = vpop.f32.mrb[0].mxu0
        %v782 = vadd.f32 %v582, %v781
        %v783 = vpop.f32.mrb[0].mxu0
        %v784 = vadd.f32 %v578, %v783
        %v785 = vpop.f32.mrb[0].mxu0
        %v786 = vadd.f32 %v582, %v785
        %787 = vdwg.mxu0
        %v788 = vmax.f32 %v780, 0.0
        %v789 = vmax.f32 %v782, 0.0
        %v790 = vmax.f32 %v784, 0.0
        %v791 = vmax.f32 %v786, 0.0
        %v792 = vpack.c.bf16 %v790, %v788
        %v793 = vpack.c.bf16 %v791, %v789
        %v794 = vld [vmem:[#allocation7] sm:$0xff]
        %v795 = vld [vmem:[#allocation7 + $0x8] sm:$0xff]
        %v796 = vld [vmem:[#allocation7 + $0x10] sm:$0xff]
        %v797 = vld [vmem:[#allocation7 + $0x18] sm:$0xff]
        %v798 = vld [vmem:[#allocation7 + $0x20] sm:$0xff]
        %v799 = vld [vmem:[#allocation7 + $0x28] sm:$0xff]
        %v800 = vld [vmem:[#allocation7 + $0x30] sm:$0xff]
        %v801 = vld [vmem:[#allocation7 + $0x38] sm:$0xff]
        %v802 = vld [vmem:[#allocation7 + $0x40] sm:$0xff]
        %v803 = vld [vmem:[#allocation7 + $0x48] sm:$0xff]
        %v804 = vld [vmem:[#allocation7 + $0x50] sm:$0xff]
        %v805 = vld [vmem:[#allocation7 + $0x58] sm:$0xff]
        %v806 = vld [vmem:[#allocation7 + $0x60] sm:$0xff]
        %v807 = vld [vmem:[#allocation7 + $0x68] sm:$0xff]
        %v808 = vld [vmem:[#allocation7 + $0x70] sm:$0xff]
        %v809 = vld [vmem:[#allocation7 + $0x78] sm:$0xff]
        %v810 = vld [vmem:[#allocation7 + $0x80] sm:$0xff]
        %v811 = vld [vmem:[#allocation7 + $0x88] sm:$0xff]
        %v812 = vld [vmem:[#allocation7 + $0x90] sm:$0xff]
        %v813 = vld [vmem:[#allocation7 + $0x98] sm:$0xff]
        %v814 = vld [vmem:[#allocation7 + $0xa0] sm:$0xff]
        %v815 = vld [vmem:[#allocation7 + $0xa8] sm:$0xff]
        %v816 = vld [vmem:[#allocation7 + $0xb0] sm:$0xff]
        %v817 = vld [vmem:[#allocation7 + $0xb8] sm:$0xff]
        %v818 = vld [vmem:[#allocation7 + $0xc0] sm:$0xff]
        %v819 = vld [vmem:[#allocation7 + $0xc8] sm:$0xff]
        %v820 = vld [vmem:[#allocation7 + $0xd0] sm:$0xff]
        %v821 = vld [vmem:[#allocation7 + $0xd8] sm:$0xff]
        %v822 = vld [vmem:[#allocation7 + $0xe0] sm:$0xff]
        %v823 = vld [vmem:[#allocation7 + $0xe8] sm:$0xff]
        %v824 = vld [vmem:[#allocation7 + $0xf0] sm:$0xff]
        %v825 = vld [vmem:[#allocation7 + $0xf8] sm:$0xff]
        %v826 = vld [vmem:[#allocation8] sm:$0x3]
        %v828 = vlaneseq
        %v829 = vshrl.u32 %v828, 7
        %v830 = vsub.s32 0, %v829
        %v831 = vrot.slane %v826, %v830
        %v832 = vlaneseq
        %v833 = vshrl.u32 %v832, 7
        %v834 = vsub.s32 1, %v833
        %v835 = vrot.slane %v826, %v834
        %v870 = vunpack.c.l.b16 %v794
        %v871 = vunpack.c.h.b16 %v794
        %v872 = vunpack.c.l.b16 %v795
        %v873 = vunpack.c.h.b16 %v795
        %v874 = vunpack.c.l.b16 %v796
        %v875 = vunpack.c.h.b16 %v796
        %v876 = vunpack.c.l.b16 %v797
        %v877 = vunpack.c.h.b16 %v797
        %v878 = vunpack.c.l.b16 %v798
        %v879 = vunpack.c.h.b16 %v798
        %v880 = vunpack.c.l.b16 %v799
        %v881 = vunpack.c.h.b16 %v799
        %v882 = vunpack.c.l.b16 %v800
        %v883 = vunpack.c.h.b16 %v800
        %v884 = vunpack.c.l.b16 %v801
        %v885 = vunpack.c.h.b16 %v801
        %v886 = vunpack.c.l.b16 %v802
        %v887 = vunpack.c.h.b16 %v802
        %v888 = vunpack.c.l.b16 %v803
        %v889 = vunpack.c.h.b16 %v803
        %v890 = vunpack.c.l.b16 %v804
        %v891 = vunpack.c.h.b16 %v804
        %v892 = vunpack.c.l.b16 %v805
        %v893 = vunpack.c.h.b16 %v805
        %v894 = vunpack.c.l.b16 %v806
        %v895 = vunpack.c.h.b16 %v806
        %v896 = vunpack.c.l.b16 %v807
        %v897 = vunpack.c.h.b16 %v807
        %v898 = vunpack.c.l.b16 %v808
        %v899 = vunpack.c.h.b16 %v808
        %v900 = vunpack.c.l.b16 %v809
        %v901 = vunpack.c.h.b16 %v809
        %v902 = vunpack.c.l.b16 %v810
        %v903 = vunpack.c.h.b16 %v810
        %v904 = vunpack.c.l.b16 %v811
        %v905 = vunpack.c.h.b16 %v811
        %v906 = vunpack.c.l.b16 %v812
        %v907 = vunpack.c.h.b16 %v812
        %v908 = vunpack.c.l.b16 %v813
        %v909 = vunpack.c.h.b16 %v813
        %v910 = vunpack.c.l.b16 %v814
        %v911 = vunpack.c.h.b16 %v814
        %v912 = vunpack.c.l.b16 %v815
        %v913 = vunpack.c.h.b16 %v815
        %v914 = vunpack.c.l.b16 %v816
        %v915 = vunpack.c.h.b16 %v816
        %v916 = vunpack.c.l.b16 %v817
        %v917 = vunpack.c.h.b16 %v817
        %v918 = vunpack.c.l.b16 %v818
        %v919 = vunpack.c.h.b16 %v818
        %v920 = vunpack.c.l.b16 %v819
        %v921 = vunpack.c.h.b16 %v819
        %v922 = vunpack.c.l.b16 %v820
        %v923 = vunpack.c.h.b16 %v820
        %v924 = vunpack.c.l.b16 %v821
        %v925 = vunpack.c.h.b16 %v821
        %v926 = vunpack.c.l.b16 %v822
        %v927 = vunpack.c.h.b16 %v822
        %v928 = vunpack.c.l.b16 %v823
        %v929 = vunpack.c.h.b16 %v823
        %v930 = vunpack.c.l.b16 %v824
        %v931 = vunpack.c.h.b16 %v824
        %v932 = vunpack.c.l.b16 %v825
        %v933 = vunpack.c.h.b16 %v825
        %v934 = vpack.c.b16 %v872, %v870
        %v935 = vpack.c.b16 %v873, %v871
        %v936 = vpack.c.b16 %v876, %v874
        %v937 = vpack.c.b16 %v877, %v875
        %v938 = vpack.c.b16 %v880, %v878
        %v939 = vpack.c.b16 %v881, %v879
        %v940 = vpack.c.b16 %v884, %v882
        %v941 = vpack.c.b16 %v885, %v883
        %v942 = vpack.c.b16 %v888, %v886
        %v943 = vpack.c.b16 %v889, %v887
        %v944 = vpack.c.b16 %v892, %v890
        %v945 = vpack.c.b16 %v893, %v891
        %v946 = vpack.c.b16 %v896, %v894
        %v947 = vpack.c.b16 %v897, %v895
        %v948 = vpack.c.b16 %v900, %v898
        %v949 = vpack.c.b16 %v901, %v899
        %v950 = vpack.c.b16 %v904, %v902
        %v951 = vpack.c.b16 %v905, %v903
        %v952 = vpack.c.b16 %v908, %v906
        %v953 = vpack.c.b16 %v909, %v907
        %v954 = vpack.c.b16 %v912, %v910
        %v955 = vpack.c.b16 %v913, %v911
        %v956 = vpack.c.b16 %v916, %v914
        %v957 = vpack.c.b16 %v917, %v915
        %v958 = vpack.c.b16 %v920, %v918
        %v959 = vpack.c.b16 %v921, %v919
        %v960 = vpack.c.b16 %v924, %v922
        %v961 = vpack.c.b16 %v925, %v923
        %v962 = vpack.c.b16 %v928, %v926
        %v963 = vpack.c.b16 %v929, %v927
        %v964 = vpack.c.b16 %v932, %v930
        %v965 = vpack.c.b16 %v933, %v931
        %998 = vmatprep.subr.bf16.mxu0 %v935
        %999 = vmatpush1.bf16.msra.mxu0 %v934
        %1000 = vmatprep.subr.bf16.mxu0 %v937
        %1001 = vmatpush1.bf16.msra.mxu0 %v936
        %1002 = vmatprep.subr.bf16.mxu0 %v939
        %1003 = vmatpush1.bf16.msra.mxu0 %v938
        %1004 = vmatprep.subr.bf16.mxu0 %v941
        %1005 = vmatpush1.bf16.msra.mxu0 %v940
        %1006 = vmatprep.subr.bf16.mxu0 %v943
        %1007 = vmatpush1.bf16.msra.mxu0 %v942
        %1008 = vmatprep.subr.bf16.mxu0 %v945
        %1009 = vmatpush1.bf16.msra.mxu0 %v944
        %1010 = vmatprep.subr.bf16.mxu0 %v947
        %1011 = vmatpush1.bf16.msra.mxu0 %v946
        %1012 = vmatprep.subr.bf16.mxu0 %v949
        %1013 = vmatpush1.bf16.msra.mxu0 %v948
        %1014 = vmatprep.subr.bf16.mxu0 %v951
        %1015 = vmatpush1.bf16.msra.mxu0 %v950
        %1016 = vmatprep.subr.bf16.mxu0 %v953
        %1017 = vmatpush1.bf16.msra.mxu0 %v952
        %1018 = vmatprep.subr.bf16.mxu0 %v955
        %1019 = vmatpush1.bf16.msra.mxu0 %v954
        %1020 = vmatprep.subr.bf16.mxu0 %v957
        %1021 = vmatpush1.bf16.msra.mxu0 %v956
        %1022 = vmatprep.subr.bf16.mxu0 %v959
        %1023 = vmatpush1.bf16.msra.mxu0 %v958
        %1024 = vmatprep.subr.bf16.mxu0 %v961
        %1025 = vmatpush1.bf16.msra.mxu0 %v960
        %1026 = vmatprep.subr.bf16.mxu0 %v963
        %1027 = vmatpush1.bf16.msra.mxu0 %v962
        %1028 = vmatprep.subr.bf16.mxu0 %v965
        %1029 = vmatpush1.bf16.msra.mxu0 %v964
        %1030 = vmatprep.mubr.bf16.mxu0 %v793
        %1031 = vmatmul.mubr.bf16.gmra.mrb[0].mxu0 %v792
        %v1032 = vpop.f32.mrb[0].mxu0
        %v1033 = vadd.f32 %v831, %v1032
        %v1034 = vpop.f32.mrb[0].mxu0
        %v1035 = vadd.f32 %v835, %v1034
        %v1036 = vpop.f32.mrb[0].mxu0
        %v1037 = vadd.f32 %v831, %v1036
        %v1038 = vpop.f32.mrb[0].mxu0
        %v1039 = vadd.f32 %v835, %v1038
        %1040 = vdwg.mxu0
        %v1041 = vmax.f32 %v1033, 0.0
        %v1042 = vmax.f32 %v1035, 0.0
        %v1043 = vmax.f32 %v1037, 0.0
        %v1044 = vmax.f32 %v1039, 0.0
        %v1045 = vadd.f32 %v535, %v1041
        %v1046 = vadd.f32 %v536, %v1042
        %v1047 = vadd.f32 %v537, %v1043
        %v1048 = vadd.f32 %v538, %v1044
        %v1049 = vpack.c.bf16 %v1047, %v1045
        %v1050 = vpack.c.bf16 %v1048, %v1046
        %s1051 = scalar_lea.vmem [#allocation2], 256
        %v1052 = vld [vmem:[%s1051] sm:$0xff]
        %v1053 = vld [vmem:[%s1051 + $0x8] sm:$0xff]
        %v1054 = vld [vmem:[%s1051 + $0x10] sm:$0xff]
        %v1055 = vld [vmem:[%s1051 + $0x18] sm:$0xff]
        %v1056 = vld [vmem:[%s1051 + $0x20] sm:$0xff]
        %v1057 = vld [vmem:[%s1051 + $0x28] sm:$0xff]
        %v1058 = vld [vmem:[%s1051 + $0x30] sm:$0xff]
        %v1059 = vld [vmem:[%s1051 + $0x38] sm:$0xff]
        %v1060 = vld [vmem:[%s1051 + $0x40] sm:$0xff]
        %v1061 = vld [vmem:[%s1051 + $0x48] sm:$0xff]
        %v1062 = vld [vmem:[%s1051 + $0x50] sm:$0xff]
        %v1063 = vld [vmem:[%s1051 + $0x58] sm:$0xff]
        %v1064 = vld [vmem:[%s1051 + $0x60] sm:$0xff]
        %v1065 = vld [vmem:[%s1051 + $0x68] sm:$0xff]
        %v1066 = vld [vmem:[%s1051 + $0x70] sm:$0xff]
        %v1067 = vld [vmem:[%s1051 + $0x78] sm:$0xff]
        %v1068 = vld [vmem:[%s1051 + $0x80] sm:$0xff]
        %v1069 = vld [vmem:[%s1051 + $0x88] sm:$0xff]
        %v1070 = vld [vmem:[%s1051 + $0x90] sm:$0xff]
        %v1071 = vld [vmem:[%s1051 + $0x98] sm:$0xff]
        %v1072 = vld [vmem:[%s1051 + $0xa0] sm:$0xff]
        %v1073 = vld [vmem:[%s1051 + $0xa8] sm:$0xff]
        %v1074 = vld [vmem:[%s1051 + $0xb0] sm:$0xff]
        %v1075 = vld [vmem:[%s1051 + $0xb8] sm:$0xff]
        %v1076 = vld [vmem:[%s1051 + $0xc0] sm:$0xff]
        %v1077 = vld [vmem:[%s1051 + $0xc8] sm:$0xff]
        %v1078 = vld [vmem:[%s1051 + $0xd0] sm:$0xff]
        %v1079 = vld [vmem:[%s1051 + $0xd8] sm:$0xff]
        %v1080 = vld [vmem:[%s1051 + $0xe0] sm:$0xff]
        %v1081 = vld [vmem:[%s1051 + $0xe8] sm:$0xff]
        %v1082 = vld [vmem:[%s1051 + $0xf0] sm:$0xff]
        %v1083 = vld [vmem:[%s1051 + $0xf8] sm:$0xff]
        %s1084 = scalar_lea.vmem [#allocation5], 2
        %v1085 = vld [vmem:[%s1084] sm:$0x3]
        %v1087 = vlaneseq
        %v1088 = vshrl.u32 %v1087, 7
        %v1089 = vsub.s32 0, %v1088
        %v1090 = vrot.slane %v1085, %v1089
        %v1091 = vlaneseq
        %v1092 = vshrl.u32 %v1091, 7
        %v1093 = vsub.s32 1, %v1092
        %v1094 = vrot.slane %v1085, %v1093
        %v1129 = vunpack.c.l.b16 %v1052
        %v1130 = vunpack.c.h.b16 %v1052
        %v1131 = vunpack.c.l.b16 %v1053
        %v1132 = vunpack.c.h.b16 %v1053
        %v1133 = vunpack.c.l.b16 %v1054
        %v1134 = vunpack.c.h.b16 %v1054
        %v1135 = vunpack.c.l.b16 %v1055
        %v1136 = vunpack.c.h.b16 %v1055
        %v1137 = vunpack.c.l.b16 %v1056
        %v1138 = vunpack.c.h.b16 %v1056
        %v1139 = vunpack.c.l.b16 %v1057
        %v1140 = vunpack.c.h.b16 %v1057
        %v1141 = vunpack.c.l.b16 %v1058
        %v1142 = vunpack.c.h.b16 %v1058
        %v1143 = vunpack.c.l.b16 %v1059
        %v1144 = vunpack.c.h.b16 %v1059
        %v1145 = vunpack.c.l.b16 %v1060
        %v1146 = vunpack.c.h.b16 %v1060
        %v1147 = vunpack.c.l.b16 %v1061
        %v1148 = vunpack.c.h.b16 %v1061
        %v1149 = vunpack.c.l.b16 %v1062
        %v1150 = vunpack.c.h.b16 %v1062
        %v1151 = vunpack.c.l.b16 %v1063
        %v1152 = vunpack.c.h.b16 %v1063
        %v1153 = vunpack.c.l.b16 %v1064
        %v1154 = vunpack.c.h.b16 %v1064
        %v1155 = vunpack.c.l.b16 %v1065
        %v1156 = vunpack.c.h.b16 %v1065
        %v1157 = vunpack.c.l.b16 %v1066
        %v1158 = vunpack.c.h.b16 %v1066
        %v1159 = vunpack.c.l.b16 %v1067
        %v1160 = vunpack.c.h.b16 %v1067
        %v1161 = vunpack.c.l.b16 %v1068
        %v1162 = vunpack.c.h.b16 %v1068
        %v1163 = vunpack.c.l.b16 %v1069
        %v1164 = vunpack.c.h.b16 %v1069
        %v1165 = vunpack.c.l.b16 %v1070
        %v1166 = vunpack.c.h.b16 %v1070
        %v1167 = vunpack.c.l.b16 %v1071
        %v1168 = vunpack.c.h.b16 %v1071
        %v1169 = vunpack.c.l.b16 %v1072
        %v1170 = vunpack.c.h.b16 %v1072
        %v1171 = vunpack.c.l.b16 %v1073
        %v1172 = vunpack.c.h.b16 %v1073
        %v1173 = vunpack.c.l.b16 %v1074
        %v1174 = vunpack.c.h.b16 %v1074
        %v1175 = vunpack.c.l.b16 %v1075
        %v1176 = vunpack.c.h.b16 %v1075
        %v1177 = vunpack.c.l.b16 %v1076
        %v1178 = vunpack.c.h.b16 %v1076
        %v1179 = vunpack.c.l.b16 %v1077
        %v1180 = vunpack.c.h.b16 %v1077
        %v1181 = vunpack.c.l.b16 %v1078
        %v1182 = vunpack.c.h.b16 %v1078
        %v1183 = vunpack.c.l.b16 %v1079
        %v1184 = vunpack.c.h.b16 %v1079
        %v1185 = vunpack.c.l.b16 %v1080
        %v1186 = vunpack.c.h.b16 %v1080
        %v1187 = vunpack.c.l.b16 %v1081
        %v1188 = vunpack.c.h.b16 %v1081
        %v1189 = vunpack.c.l.b16 %v1082
        %v1190 = vunpack.c.h.b16 %v1082
        %v1191 = vunpack.c.l.b16 %v1083
        %v1192 = vunpack.c.h.b16 %v1083
        %v1193 = vpack.c.b16 %v1131, %v1129
        %v1194 = vpack.c.b16 %v1132, %v1130
        %v1195 = vpack.c.b16 %v1135, %v1133
        %v1196 = vpack.c.b16 %v1136, %v1134
        %v1197 = vpack.c.b16 %v1139, %v1137
        %v1198 = vpack.c.b16 %v1140, %v1138
        %v1199 = vpack.c.b16 %v1143, %v1141
        %v1200 = vpack.c.b16 %v1144, %v1142
        %v1201 = vpack.c.b16 %v1147, %v1145
        %v1202 = vpack.c.b16 %v1148, %v1146
        %v1203 = vpack.c.b16 %v1151, %v1149
        %v1204 = vpack.c.b16 %v1152, %v1150
        %v1205 = vpack.c.b16 %v1155, %v1153
        %v1206 = vpack.c.b16 %v1156, %v1154
        %v1207 = vpack.c.b16 %v1159, %v1157
        %v1208 = vpack.c.b16 %v1160, %v1158
        %v1209 = vpack.c.b16 %v1163, %v1161
        %v1210 = vpack.c.b16 %v1164, %v1162
        %v1211 = vpack.c.b16 %v1167, %v1165
        %v1212 = vpack.c.b16 %v1168, %v1166
        %v1213 = vpack.c.b16 %v1171, %v1169
        %v1214 = vpack.c.b16 %v1172, %v1170
        %v1215 = vpack.c.b16 %v1175, %v1173
        %v1216 = vpack.c.b16 %v1176, %v1174
        %v1217 = vpack.c.b16 %v1179, %v1177
        %v1218 = vpack.c.b16 %v1180, %v1178
        %v1219 = vpack.c.b16 %v1183, %v1181
        %v1220 = vpack.c.b16 %v1184, %v1182
        %v1221 = vpack.c.b16 %v1187, %v1185
        %v1222 = vpack.c.b16 %v1188, %v1186
        %v1223 = vpack.c.b16 %v1191, %v1189
        %v1224 = vpack.c.b16 %v1192, %v1190
        %1257 = vmatprep.subr.bf16.mxu0 %v1194
        %1258 = vmatpush1.bf16.msra.mxu0 %v1193
        %1259 = vmatprep.subr.bf16.mxu0 %v1196
        %1260 = vmatpush1.bf16.msra.mxu0 %v1195
        %1261 = vmatprep.subr.bf16.mxu0 %v1198
        %1262 = vmatpush1.bf16.msra.mxu0 %v1197
        %1263 = vmatprep.subr.bf16.mxu0 %v1200
        %1264 = vmatpush1.bf16.msra.mxu0 %v1199
        %1265 = vmatprep.subr.bf16.mxu0 %v1202
        %1266 = vmatpush1.bf16.msra.mxu0 %v1201
        %1267 = vmatprep.subr.bf16.mxu0 %v1204
        %1268 = vmatpush1.bf16.msra.mxu0 %v1203
        %1269 = vmatprep.subr.bf16.mxu0 %v1206
        %1270 = vmatpush1.bf16.msra.mxu0 %v1205
        %1271 = vmatprep.subr.bf16.mxu0 %v1208
        %1272 = vmatpush1.bf16.msra.mxu0 %v1207
        %1273 = vmatprep.subr.bf16.mxu0 %v1210
        %1274 = vmatpush1.bf16.msra.mxu0 %v1209
        %1275 = vmatprep.subr.bf16.mxu0 %v1212
        %1276 = vmatpush1.bf16.msra.mxu0 %v1211
        %1277 = vmatprep.subr.bf16.mxu0 %v1214
        %1278 = vmatpush1.bf16.msra.mxu0 %v1213
        %1279 = vmatprep.subr.bf16.mxu0 %v1216
        %1280 = vmatpush1.bf16.msra.mxu0 %v1215
        %1281 = vmatprep.subr.bf16.mxu0 %v1218
        %1282 = vmatpush1.bf16.msra.mxu0 %v1217
        %1283 = vmatprep.subr.bf16.mxu0 %v1220
        %1284 = vmatpush1.bf16.msra.mxu0 %v1219
        %1285 = vmatprep.subr.bf16.mxu0 %v1222
        %1286 = vmatpush1.bf16.msra.mxu0 %v1221
        %1287 = vmatprep.subr.bf16.mxu0 %v1224
        %1288 = vmatpush1.bf16.msra.mxu0 %v1223
        %1289 = vmatprep.mubr.bf16.mxu0 %v1050
        %1290 = vmatmul.mubr.bf16.gmra.mrb[0].mxu0 %v1049
        %v1291 = vpop.f32.mrb[0].mxu0
        %v1292 = vadd.f32 %v1090, %v1291
        %v1293 = vpop.f32.mrb[0].mxu0
        %v1294 = vadd.f32 %v1094, %v1293
        %v1295 = vpop.f32.mrb[0].mxu0
        %v1296 = vadd.f32 %v1090, %v1295
        %v1297 = vpop.f32.mrb[0].mxu0
        %v1298 = vadd.f32 %v1094, %v1297
        %1299 = vdwg.mxu0
        %v1300 = vmax.f32 %v1292, 0.0
        %v1301 = vmax.f32 %v1294, 0.0
        %v1302 = vmax.f32 %v1296, 0.0
        %v1303 = vmax.f32 %v1298, 0.0
        %v1304 = vpack.c.bf16 %v1302, %v1300
        %v1305 = vpack.c.bf16 %v1303, %v1301
        %s1306 = scalar_lea.vmem [#allocation7], 256
        %v1307 = vld [vmem:[%s1306] sm:$0xff]
        %v1308 = vld [vmem:[%s1306 + $0x8] sm:$0xff]
        %v1309 = vld [vmem:[%s1306 + $0x10] sm:$0xff]
        %v1310 = vld [vmem:[%s1306 + $0x18] sm:$0xff]
        %v1311 = vld [vmem:[%s1306 + $0x20] sm:$0xff]
        %v1312 = vld [vmem:[%s1306 + $0x28] sm:$0xff]
        %v1313 = vld [vmem:[%s1306 + $0x30] sm:$0xff]
        %v1314 = vld [vmem:[%s1306 + $0x38] sm:$0xff]
        %v1315 = vld [vmem:[%s1306 + $0x40] sm:$0xff]
        %v1316 = vld [vmem:[%s1306 + $0x48] sm:$0xff]
        %v1317 = vld [vmem:[%s1306 + $0x50] sm:$0xff]
        %v1318 = vld [vmem:[%s1306 + $0x58] sm:$0xff]
        %v1319 = vld [vmem:[%s1306 + $0x60] sm:$0xff]
        %v1320 = vld [vmem:[%s1306 + $0x68] sm:$0xff]
        %v1321 = vld [vmem:[%s1306 + $0x70] sm:$0xff]
        %v1322 = vld [vmem:[%s1306 + $0x78] sm:$0xff]
        %v1323 = vld [vmem:[%s1306 + $0x80] sm:$0xff]
        %v1324 = vld [vmem:[%s1306 + $0x88] sm:$0xff]
        %v1325 = vld [vmem:[%s1306 + $0x90] sm:$0xff]
        %v1326 = vld [vmem:[%s1306 + $0x98] sm:$0xff]
        %v1327 = vld [vmem:[%s1306 + $0xa0] sm:$0xff]
        %v1328 = vld [vmem:[%s1306 + $0xa8] sm:$0xff]
        %v1329 = vld [vmem:[%s1306 + $0xb0] sm:$0xff]
        %v1330 = vld [vmem:[%s1306 + $0xb8] sm:$0xff]
        %v1331 = vld [vmem:[%s1306 + $0xc0] sm:$0xff]
        %v1332 = vld [vmem:[%s1306 + $0xc8] sm:$0xff]
        %v1333 = vld [vmem:[%s1306 + $0xd0] sm:$0xff]
        %v1334 = vld [vmem:[%s1306 + $0xd8] sm:$0xff]
        %v1335 = vld [vmem:[%s1306 + $0xe0] sm:$0xff]
        %v1336 = vld [vmem:[%s1306 + $0xe8] sm:$0xff]
        %v1337 = vld [vmem:[%s1306 + $0xf0] sm:$0xff]
        %v1338 = vld [vmem:[%s1306 + $0xf8] sm:$0xff]
        %s1339 = scalar_lea.vmem [#allocation8], 2
        %v1340 = vld [vmem:[%s1339] sm:$0x3]
        %v1342 = vlaneseq
        %v1343 = vshrl.u32 %v1342, 7
        %v1344 = vsub.s32 0, %v1343
        %v1345 = vrot.slane %v1340, %v1344
        %v1346 = vlaneseq
        %v1347 = vshrl.u32 %v1346, 7
        %v1348 = vsub.s32 1, %v1347
        %v1349 = vrot.slane %v1340, %v1348
        %v1384 = vunpack.c.l.b16 %v1307
        %v1385 = vunpack.c.h.b16 %v1307
        %v1386 = vunpack.c.l.b16 %v1308
        %v1387 = vunpack.c.h.b16 %v1308
        %v1388 = vunpack.c.l.b16 %v1309
        %v1389 = vunpack.c.h.b16 %v1309
        %v1390 = vunpack.c.l.b16 %v1310
        %v1391 = vunpack.c.h.b16 %v1310
        %v1392 = vunpack.c.l.b16 %v1311
        %v1393 = vunpack.c.h.b16 %v1311
        %v1394 = vunpack.c.l.b16 %v1312
        %v1395 = vunpack.c.h.b16 %v1312
        %v1396 = vunpack.c.l.b16 %v1313
        %v1397 = vunpack.c.h.b16 %v1313
        %v1398 = vunpack.c.l.b16 %v1314
        %v1399 = vunpack.c.h.b16 %v1314
        %v1400 = vunpack.c.l.b16 %v1315
        %v1401 = vunpack.c.h.b16 %v1315
        %v1402 = vunpack.c.l.b16 %v1316
        %v1403 = vunpack.c.h.b16 %v1316
        %v1404 = vunpack.c.l.b16 %v1317
        %v1405 = vunpack.c.h.b16 %v1317
        %v1406 = vunpack.c.l.b16 %v1318
        %v1407 = vunpack.c.h.b16 %v1318
        %v1408 = vunpack.c.l.b16 %v1319
        %v1409 = vunpack.c.h.b16 %v1319
        %v1410 = vunpack.c.l.b16 %v1320
        %v1411 = vunpack.c.h.b16 %v1320
        %v1412 = vunpack.c.l.b16 %v1321
        %v1413 = vunpack.c.h.b16 %v1321
        %v1414 = vunpack.c.l.b16 %v1322
        %v1415 = vunpack.c.h.b16 %v1322
        %v1416 = vunpack.c.l.b16 %v1323
        %v1417 = vunpack.c.h.b16 %v1323
        %v1418 = vunpack.c.l.b16 %v1324
        %v1419 = vunpack.c.h.b16 %v1324
        %v1420 = vunpack.c.l.b16 %v1325
        %v1421 = vunpack.c.h.b16 %v1325
        %v1422 = vunpack.c.l.b16 %v1326
        %v1423 = vunpack.c.h.b16 %v1326
        %v1424 = vunpack.c.l.b16 %v1327
        %v1425 = vunpack.c.h.b16 %v1327
        %v1426 = vunpack.c.l.b16 %v1328
        %v1427 = vunpack.c.h.b16 %v1328
        %v1428 = vunpack.c.l.b16 %v1329
        %v1429 = vunpack.c.h.b16 %v1329
        %v1430 = vunpack.c.l.b16 %v1330
        %v1431 = vunpack.c.h.b16 %v1330
        %v1432 = vunpack.c.l.b16 %v1331
        %v1433 = vunpack.c.h.b16 %v1331
        %v1434 = vunpack.c.l.b16 %v1332
        %v1435 = vunpack.c.h.b16 %v1332
        %v1436 = vunpack.c.l.b16 %v1333
        %v1437 = vunpack.c.h.b16 %v1333
        %v1438 = vunpack.c.l.b16 %v1334
        %v1439 = vunpack.c.h.b16 %v1334
        %v1440 = vunpack.c.l.b16 %v1335
        %v1441 = vunpack.c.h.b16 %v1335
        %v1442 = vunpack.c.l.b16 %v1336
        %v1443 = vunpack.c.h.b16 %v1336
        %v1444 = vunpack.c.l.b16 %v1337
        %v1445 = vunpack.c.h.b16 %v1337
        %v1446 = vunpack.c.l.b16 %v1338
        %v1447 = vunpack.c.h.b16 %v1338
        %v1448 = vpack.c.b16 %v1386, %v1384
        %v1449 = vpack.c.b16 %v1387, %v1385
        %v1450 = vpack.c.b16 %v1390, %v1388
        %v1451 = vpack.c.b16 %v1391, %v1389
        %v1452 = vpack.c.b16 %v1394, %v1392
        %v1453 = vpack.c.b16 %v1395, %v1393
        %v1454 = vpack.c.b16 %v1398, %v1396
        %v1455 = vpack.c.b16 %v1399, %v1397
        %v1456 = vpack.c.b16 %v1402, %v1400
        %v1457 = vpack.c.b16 %v1403, %v1401
        %v1458 = vpack.c.b16 %v1406, %v1404
        %v1459 = vpack.c.b16 %v1407, %v1405
        %v1460 = vpack.c.b16 %v1410, %v1408
        %v1461 = vpack.c.b16 %v1411, %v1409
        %v1462 = vpack.c.b16 %v1414, %v1412
        %v1463 = vpack.c.b16 %v1415, %v1413
        %v1464 = vpack.c.b16 %v1418, %v1416
        %v1465 = vpack.c.b16 %v1419, %v1417
        %v1466 = vpack.c.b16 %v1422, %v1420
        %v1467 = vpack.c.b16 %v1423, %v1421
        %v1468 = vpack.c.b16 %v1426, %v1424
        %v1469 = vpack.c.b16 %v1427, %v1425
        %v1470 = vpack.c.b16 %v1430, %v1428
        %v1471 = vpack.c.b16 %v1431, %v1429
        %v1472 = vpack.c.b16 %v1434, %v1432
        %v1473 = vpack.c.b16 %v1435, %v1433
        %v1474 = vpack.c.b16 %v1438, %v1436
        %v1475 = vpack.c.b16 %v1439, %v1437
        %v1476 = vpack.c.b16 %v1442, %v1440
        %v1477 = vpack.c.b16 %v1443, %v1441
        %v1478 = vpack.c.b16 %v1446, %v1444
        %v1479 = vpack.c.b16 %v1447, %v1445
        %1512 = vmatprep.subr.bf16.mxu0 %v1449
        %1513 = vmatpush1.bf16.msra.mxu0 %v1448
        %1514 = vmatprep.subr.bf16.mxu0 %v1451
        %1515 = vmatpush1.bf16.msra.mxu0 %v1450
        %1516 = vmatprep.subr.bf16.mxu0 %v1453
        %1517 = vmatpush1.bf16.msra.mxu0 %v1452
        %1518 = vmatprep.subr.bf16.mxu0 %v1455
        %1519 = vmatpush1.bf16.msra.mxu0 %v1454
        %1520 = vmatprep.subr.bf16.mxu0 %v1457
        %1521 = vmatpush1.bf16.msra.mxu0 %v1456
        %1522 = vmatprep.subr.bf16.mxu0 %v1459
        %1523 = vmatpush1.bf16.msra.mxu0 %v1458
        %1524 = vmatprep.subr.bf16.mxu0 %v1461
        %1525 = vmatpush1.bf16.msra.mxu0 %v1460
        %1526 = vmatprep.subr.bf16.mxu0 %v1463
        %1527 = vmatpush1.bf16.msra.mxu0 %v1462
        %1528 = vmatprep.subr.bf16.mxu0 %v1465
        %1529 = vmatpush1.bf16.msra.mxu0 %v1464
        %1530 = vmatprep.subr.bf16.mxu0 %v1467
        %1531 = vmatpush1.bf16.msra.mxu0 %v1466
        %1532 = vmatprep.subr.bf16.mxu0 %v1469
        %1533 = vmatpush1.bf16.msra.mxu0 %v1468
        %1534 = vmatprep.subr.bf16.mxu0 %v1471
        %1535 = vmatpush1.bf16.msra.mxu0 %v1470
        %1536 = vmatprep.subr.bf16.mxu0 %v1473
        %1537 = vmatpush1.bf16.msra.mxu0 %v1472
        %1538 = vmatprep.subr.bf16.mxu0 %v1475
        %1539 = vmatpush1.bf16.msra.mxu0 %v1474
        %1540 = vmatprep.subr.bf16.mxu0 %v1477
        %1541 = vmatpush1.bf16.msra.mxu0 %v1476
        %1542 = vmatprep.subr.bf16.mxu0 %v1479
        %1543 = vmatpush1.bf16.msra.mxu0 %v1478
        %1544 = vmatprep.mubr.bf16.mxu0 %v1305
        %1545 = vmatmul.mubr.bf16.gmra.mrb[0].mxu0 %v1304
        %v1546 = vpop.f32.mrb[0].mxu0
        %v1547 = vadd.f32 %v1345, %v1546
        %v1548 = vpop.f32.mrb[0].mxu0
        %v1549 = vadd.f32 %v1349, %v1548
        %v1550 = vpop.f32.mrb[0].mxu0
        %v1551 = vadd.f32 %v1345, %v1550
        %v1552 = vpop.f32.mrb[0].mxu0
        %v1553 = vadd.f32 %v1349, %v1552
        %1554 = vdwg.mxu0
        %v1555 = vmax.f32 %v1547, 0.0
        %v1556 = vmax.f32 %v1549, 0.0
        %v1557 = vmax.f32 %v1551, 0.0
        %v1558 = vmax.f32 %v1553, 0.0
        %v1559 = vadd.f32 %v1045, %v1555
        %v1560 = vadd.f32 %v1046, %v1556
        %v1561 = vadd.f32 %v1047, %v1557
        %v1562 = vadd.f32 %v1048, %v1558
        %v1563 = vpack.c.bf16 %v1561, %v1559
        %v1564 = vpack.c.bf16 %v1562, %v1560
        %s1565 = scalar_lea.vmem [#allocation2], 512
        %v1566 = vld [vmem:[%s1565] sm:$0xff]
        %v1567 = vld [vmem:[%s1565 + $0x8] sm:$0xff]
        %v1568 = vld [vmem:[%s1565 + $0x10] sm:$0xff]
        %v1569 = vld [vmem:[%s1565 + $0x18] sm:$0xff]
        %v1570 = vld [vmem:[%s1565 + $0x20] sm:$0xff]
        %v1571 = vld [vmem:[%s1565 + $0x28] sm:$0xff]
        %v1572 = vld [vmem:[%s1565 + $0x30] sm:$0xff]
        %v1573 = vld [vmem:[%s1565 + $0x38] sm:$0xff]
        %v1574 = vld [vmem:[%s1565 + $0x40] sm:$0xff]
        %v1575 = vld [vmem:[%s1565 + $0x48] sm:$0xff]
        %v1576 = vld [vmem:[%s1565 + $0x50] sm:$0xff]
        %v1577 = vld [vmem:[%s1565 + $0x58] sm:$0xff]
        %v1578 = vld [vmem:[%s1565 + $0x60] sm:$0xff]
        %v1579 = vld [vmem:[%s1565 + $0x68] sm:$0xff]
        %v1580 = vld [vmem:[%s1565 + $0x70] sm:$0xff]
        %v1581 = vld [vmem:[%s1565 + $0x78] sm:$0xff]
        %v1582 = vld [vmem:[%s1565 + $0x80] sm:$0xff]
        %v1583 = vld [vmem:[%s1565 + $0x88] sm:$0xff]
        %v1584 = vld [vmem:[%s1565 + $0x90] sm:$0xff]
        %v1585 = vld [vmem:[%s1565 + $0x98] sm:$0xff]
        %v1586 = vld [vmem:[%s1565 + $0xa0] sm:$0xff]
        %v1587 = vld [vmem:[%s1565 + $0xa8] sm:$0xff]
        %v1588 = vld [vmem:[%s1565 + $0xb0] sm:$0xff]
        %v1589 = vld [vmem:[%s1565 + $0xb8] sm:$0xff]
        %v1590 = vld [vmem:[%s1565 + $0xc0] sm:$0xff]
        %v1591 = vld [vmem:[%s1565 + $0xc8] sm:$0xff]
        %v1592 = vld [vmem:[%s1565 + $0xd0] sm:$0xff]
        %v1593 = vld [vmem:[%s1565 + $0xd8] sm:$0xff]
        %v1594 = vld [vmem:[%s1565 + $0xe0] sm:$0xff]
        %v1595 = vld [vmem:[%s1565 + $0xe8] sm:$0xff]
        %v1596 = vld [vmem:[%s1565 + $0xf0] sm:$0xff]
        %v1597 = vld [vmem:[%s1565 + $0xf8] sm:$0xff]
        %s1598 = scalar_lea.vmem [#allocation5], 4
        %v1599 = vld [vmem:[%s1598] sm:$0x3]
        %v1601 = vlaneseq
        %v1602 = vshrl.u32 %v1601, 7
        %v1603 = vsub.s32 0, %v1602
        %v1604 = vrot.slane %v1599, %v1603
        %v1605 = vlaneseq
        %v1606 = vshrl.u32 %v1605, 7
        %v1607 = vsub.s32 1, %v1606
        %v1608 = vrot.slane %v1599, %v1607
        %v1643 = vunpack.c.l.b16 %v1566
        %v1644 = vunpack.c.h.b16 %v1566
        %v1645 = vunpack.c.l.b16 %v1567
        %v1646 = vunpack.c.h.b16 %v1567
        %v1647 = vunpack.c.l.b16 %v1568
        %v1648 = vunpack.c.h.b16 %v1568
        %v1649 = vunpack.c.l.b16 %v1569
        %v1650 = vunpack.c.h.b16 %v1569
        %v1651 = vunpack.c.l.b16 %v1570
        %v1652 = vunpack.c.h.b16 %v1570
        %v1653 = vunpack.c.l.b16 %v1571
        %v1654 = vunpack.c.h.b16 %v1571
        %v1655 = vunpack.c.l.b16 %v1572
        %v1656 = vunpack.c.h.b16 %v1572
        %v1657 = vunpack.c.l.b16 %v1573
        %v1658 = vunpack.c.h.b16 %v1573
        %v1659 = vunpack.c.l.b16 %v1574
        %v1660 = vunpack.c.h.b16 %v1574
        %v1661 = vunpack.c.l.b16 %v1575
        %v1662 = vunpack.c.h.b16 %v1575
        %v1663 = vunpack.c.l.b16 %v1576
        %v1664 = vunpack.c.h.b16 %v1576
        %v1665 = vunpack.c.l.b16 %v1577
        %v1666 = vunpack.c.h.b16 %v1577
        %v1667 = vunpack.c.l.b16 %v1578
        %v1668 = vunpack.c.h.b16 %v1578
        %v1669 = vunpack.c.l.b16 %v1579
        %v1670 = vunpack.c.h.b16 %v1579
        %v1671 = vunpack.c.l.b16 %v1580
        %v1672 = vunpack.c.h.b16 %v1580
        %v1673 = vunpack.c.l.b16 %v1581
        %v1674 = vunpack.c.h.b16 %v1581
        %v1675 = vunpack.c.l.b16 %v1582
        %v1676 = vunpack.c.h.b16 %v1582
        %v1677 = vunpack.c.l.b16 %v1583
        %v1678 = vunpack.c.h.b16 %v1583
        %v1679 = vunpack.c.l.b16 %v1584
        %v1680 = vunpack.c.h.b16 %v1584
        %v1681 = vunpack.c.l.b16 %v1585
        %v1682 = vunpack.c.h.b16 %v1585
        %v1683 = vunpack.c.l.b16 %v1586
        %v1684 = vunpack.c.h.b16 %v1586
        %v1685 = vunpack.c.l.b16 %v1587
        %v1686 = vunpack.c.h.b16 %v1587
        %v1687 = vunpack.c.l.b16 %v1588
        %v1688 = vunpack.c.h.b16 %v1588
        %v1689 = vunpack.c.l.b16 %v1589
        %v1690 = vunpack.c.h.b16 %v1589
        %v1691 = vunpack.c.l.b16 %v1590
        %v1692 = vunpack.c.h.b16 %v1590
        %v1693 = vunpack.c.l.b16 %v1591
        %v1694 = vunpack.c.h.b16 %v1591
        %v1695 = vunpack.c.l.b16 %v1592
        %v1696 = vunpack.c.h.b16 %v1592
        %v1697 = vunpack.c.l.b16 %v1593
        %v1698 = vunpack.c.h.b16 %v1593
        %v1699 = vunpack.c.l.b16 %v1594
        %v1700 = vunpack.c.h.b16 %v1594
        %v1701 = vunpack.c.l.b16 %v1595
        %v1702 = vunpack.c.h.b16 %v1595
        %v1703 = vunpack.c.l.b16 %v1596
        %v1704 = vunpack.c.h.b16 %v1596
        %v1705 = vunpack.c.l.b16 %v1597
        %v1706 = vunpack.c.h.b16 %v1597
        %v1707 = vpack.c.b16 %v1645, %v1643
        %v1708 = vpack.c.b16 %v1646, %v1644
        %v1709 = vpack.c.b16 %v1649, %v1647
        %v1710 = vpack.c.b16 %v1650, %v1648
        %v1711 = vpack.c.b16 %v1653, %v1651
        %v1712 = vpack.c.b16 %v1654, %v1652
        %v1713 = vpack.c.b16 %v1657, %v1655
        %v1714 = vpack.c.b16 %v1658, %v1656
        %v1715 = vpack.c.b16 %v1661, %v1659
        %v1716 = vpack.c.b16 %v1662, %v1660
        %v1717 = vpack.c.b16 %v1665, %v1663
        %v1718 = vpack.c.b16 %v1666, %v1664
        %v1719 = vpack.c.b16 %v1669, %v1667
        %v1720 = vpack.c.b16 %v1670, %v1668
        %v1721 = vpack.c.b16 %v1673, %v1671
        %v1722 = vpack.c.b16 %v1674, %v1672
        %v1723 = vpack.c.b16 %v1677, %v1675
        %v1724 = vpack.c.b16 %v1678, %v1676
        %v1725 = vpack.c.b16 %v1681, %v1679
        %v1726 = vpack.c.b16 %v1682, %v1680
        %v1727 = vpack.c.b16 %v1685, %v1683
        %v1728 = vpack.c.b16 %v1686, %v1684
        %v1729 = vpack.c.b16 %v1689, %v1687
        %v1730 = vpack.c.b16 %v1690, %v1688
        %v1731 = vpack.c.b16 %v1693, %v1691
        %v1732 = vpack.c.b16 %v1694, %v1692
        %v1733 = vpack.c.b16 %v1697, %v1695
        %v1734 = vpack.c.b16 %v1698, %v1696
        %v1735 = vpack.c.b16 %v1701, %v1699
        %v1736 = vpack.c.b16 %v1702, %v1700
        %v1737 = vpack.c.b16 %v1705, %v1703
        %v1738 = vpack.c.b16 %v1706, %v1704
        %1771 = vmatprep.subr.bf16.mxu0 %v1708
        %1772 = vmatpush1.bf16.msra.mxu0 %v1707
        %1773 = vmatprep.subr.bf16.mxu0 %v1710
        %1774 = vmatpush1.bf16.msra.mxu0 %v1709
        %1775 = vmatprep.subr.bf16.mxu0 %v1712
        %1776 = vmatpush1.bf16.msra.mxu0 %v1711
        %1777 = vmatprep.subr.bf16.mxu0 %v1714
        %1778 = vmatpush1.bf16.msra.mxu0 %v1713
        %1779 = vmatprep.subr.bf16.mxu0 %v1716
        %1780 = vmatpush1.bf16.msra.mxu0 %v1715
        %1781 = vmatprep.subr.bf16.mxu0 %v1718
        %1782 = vmatpush1.bf16.msra.mxu0 %v1717
        %1783 = vmatprep.subr.bf16.mxu0 %v1720
        %1784 = vmatpush1.bf16.msra.mxu0 %v1719
        %1785 = vmatprep.subr.bf16.mxu0 %v1722
        %1786 = vmatpush1.bf16.msra.mxu0 %v1721
        %1787 = vmatprep.subr.bf16.mxu0 %v1724
        %1788 = vmatpush1.bf16.msra.mxu0 %v1723
        %1789 = vmatprep.subr.bf16.mxu0 %v1726
        %1790 = vmatpush1.bf16.msra.mxu0 %v1725
        %1791 = vmatprep.subr.bf16.mxu0 %v1728
        %1792 = vmatpush1.bf16.msra.mxu0 %v1727
        %1793 = vmatprep.subr.bf16.mxu0 %v1730
        %1794 = vmatpush1.bf16.msra.mxu0 %v1729
        %1795 = vmatprep.subr.bf16.mxu0 %v1732
        %1796 = vmatpush1.bf16.msra.mxu0 %v1731
        %1797 = vmatprep.subr.bf16.mxu0 %v1734
        %1798 = vmatpush1.bf16.msra.mxu0 %v1733
        %1799 = vmatprep.subr.bf16.mxu0 %v1736
        %1800 = vmatpush1.bf16.msra.mxu0 %v1735
        %1801 = vmatprep.subr.bf16.mxu0 %v1738
        %1802 = vmatpush1.bf16.msra.mxu0 %v1737
        %1803 = vmatprep.mubr.bf16.mxu0 %v1564
        %1804 = vmatmul.mubr.bf16.gmra.mrb[0].mxu0 %v1563
        %v1805 = vpop.f32.mrb[0].mxu0
        %v1806 = vadd.f32 %v1604, %v1805
        %v1807 = vpop.f32.mrb[0].mxu0
        %v1808 = vadd.f32 %v1608, %v1807
        %v1809 = vpop.f32.mrb[0].mxu0
        %v1810 = vadd.f32 %v1604, %v1809
        %v1811 = vpop.f32.mrb[0].mxu0
        %v1812 = vadd.f32 %v1608, %v1811
        %1813 = vdwg.mxu0
        %v1814 = vmax.f32 %v1806, 0.0
        %v1815 = vmax.f32 %v1808, 0.0
        %v1816 = vmax.f32 %v1810, 0.0
        %v1817 = vmax.f32 %v1812, 0.0
        %v1818 = vpack.c.bf16 %v1816, %v1814
        %v1819 = vpack.c.bf16 %v1817, %v1815
        %s1820 = scalar_lea.vmem [#allocation7], 512
        %v1821 = vld [vmem:[%s1820] sm:$0xff]
        %v1822 = vld [vmem:[%s1820 + $0x8] sm:$0xff]
        %v1823 = vld [vmem:[%s1820 + $0x10] sm:$0xff]
        %v1824 = vld [vmem:[%s1820 + $0x18] sm:$0xff]
        %v1825 = vld [vmem:[%s1820 + $0x20] sm:$0xff]
        %v1826 = vld [vmem:[%s1820 + $0x28] sm:$0xff]
        %v1827 = vld [vmem:[%s1820 + $0x30] sm:$0xff]
        %v1828 = vld [vmem:[%s1820 + $0x38] sm:$0xff]
        %v1829 = vld [vmem:[%s1820 + $0x40] sm:$0xff]
        %v1830 = vld [vmem:[%s1820 + $0x48] sm:$0xff]
        %v1831 = vld [vmem:[%s1820 + $0x50] sm:$0xff]
        %v1832 = vld [vmem:[%s1820 + $0x58] sm:$0xff]
        %v1833 = vld [vmem:[%s1820 + $0x60] sm:$0xff]
        %v1834 = vld [vmem:[%s1820 + $0x68] sm:$0xff]
        %v1835 = vld [vmem:[%s1820 + $0x70] sm:$0xff]
        %v1836 = vld [vmem:[%s1820 + $0x78] sm:$0xff]
        %v1837 = vld [vmem:[%s1820 + $0x80] sm:$0xff]
        %v1838 = vld [vmem:[%s1820 + $0x88] sm:$0xff]
        %v1839 = vld [vmem:[%s1820 + $0x90] sm:$0xff]
        %v1840 = vld [vmem:[%s1820 + $0x98] sm:$0xff]
        %v1841 = vld [vmem:[%s1820 + $0xa0] sm:$0xff]
        %v1842 = vld [vmem:[%s1820 + $0xa8] sm:$0xff]
        %v1843 = vld [vmem:[%s1820 + $0xb0] sm:$0xff]
        %v1844 = vld [vmem:[%s1820 + $0xb8] sm:$0xff]
        %v1845 = vld [vmem:[%s1820 + $0xc0] sm:$0xff]
        %v1846 = vld [vmem:[%s1820 + $0xc8] sm:$0xff]
        %v1847 = vld [vmem:[%s1820 + $0xd0] sm:$0xff]
        %v1848 = vld [vmem:[%s1820 + $0xd8] sm:$0xff]
        %v1849 = vld [vmem:[%s1820 + $0xe0] sm:$0xff]
        %v1850 = vld [vmem:[%s1820 + $0xe8] sm:$0xff]
        %v1851 = vld [vmem:[%s1820 + $0xf0] sm:$0xff]
        %v1852 = vld [vmem:[%s1820 + $0xf8] sm:$0xff]
        %s1853 = scalar_lea.vmem [#allocation8], 4
        %v1854 = vld [vmem:[%s1853] sm:$0x3]
        %v1856 = vlaneseq
        %v1857 = vshrl.u32 %v1856, 7
        %v1858 = vsub.s32 0, %v1857
        %v1859 = vrot.slane %v1854, %v1858
        %v1860 = vlaneseq
        %v1861 = vshrl.u32 %v1860, 7
        %v1862 = vsub.s32 1, %v1861
        %v1863 = vrot.slane %v1854, %v1862
        %v1898 = vunpack.c.l.b16 %v1821
        %v1899 = vunpack.c.h.b16 %v1821
        %v1900 = vunpack.c.l.b16 %v1822
        %v1901 = vunpack.c.h.b16 %v1822
        %v1902 = vunpack.c.l.b16 %v1823
        %v1903 = vunpack.c.h.b16 %v1823
        %v1904 = vunpack.c.l.b16 %v1824
        %v1905 = vunpack.c.h.b16 %v1824
        %v1906 = vunpack.c.l.b16 %v1825
        %v1907 = vunpack.c.h.b16 %v1825
        %v1908 = vunpack.c.l.b16 %v1826
        %v1909 = vunpack.c.h.b16 %v1826
        %v1910 = vunpack.c.l.b16 %v1827
        %v1911 = vunpack.c.h.b16 %v1827
        %v1912 = vunpack.c.l.b16 %v1828
        %v1913 = vunpack.c.h.b16 %v1828
        %v1914 = vunpack.c.l.b16 %v1829
        %v1915 = vunpack.c.h.b16 %v1829
        %v1916 = vunpack.c.l.b16 %v1830
        %v1917 = vunpack.c.h.b16 %v1830
        %v1918 = vunpack.c.l.b16 %v1831
        %v1919 = vunpack.c.h.b16 %v1831
        %v1920 = vunpack.c.l.b16 %v1832
        %v1921 = vunpack.c.h.b16 %v1832
        %v1922 = vunpack.c.l.b16 %v1833
        %v1923 = vunpack.c.h.b16 %v1833
        %v1924 = vunpack.c.l.b16 %v1834
        %v1925 = vunpack.c.h.b16 %v1834
        %v1926 = vunpack.c.l.b16 %v1835
        %v1927 = vunpack.c.h.b16 %v1835
        %v1928 = vunpack.c.l.b16 %v1836
        %v1929 = vunpack.c.h.b16 %v1836
        %v1930 = vunpack.c.l.b16 %v1837
        %v1931 = vunpack.c.h.b16 %v1837
        %v1932 = vunpack.c.l.b16 %v1838
        %v1933 = vunpack.c.h.b16 %v1838
        %v1934 = vunpack.c.l.b16 %v1839
        %v1935 = vunpack.c.h.b16 %v1839
        %v1936 = vunpack.c.l.b16 %v1840
        %v1937 = vunpack.c.h.b16 %v1840
        %v1938 = vunpack.c.l.b16 %v1841
        %v1939 = vunpack.c.h.b16 %v1841
        %v1940 = vunpack.c.l.b16 %v1842
        %v1941 = vunpack.c.h.b16 %v1842
        %v1942 = vunpack.c.l.b16 %v1843
        %v1943 = vunpack.c.h.b16 %v1843
        %v1944 = vunpack.c.l.b16 %v1844
        %v1945 = vunpack.c.h.b16 %v1844
        %v1946 = vunpack.c.l.b16 %v1845
        %v1947 = vunpack.c.h.b16 %v1845
        %v1948 = vunpack.c.l.b16 %v1846
        %v1949 = vunpack.c.h.b16 %v1846
        %v1950 = vunpack.c.l.b16 %v1847
        %v1951 = vunpack.c.h.b16 %v1847
        %v1952 = vunpack.c.l.b16 %v1848
        %v1953 = vunpack.c.h.b16 %v1848
        %v1954 = vunpack.c.l.b16 %v1849
        %v1955 = vunpack.c.h.b16 %v1849
        %v1956 = vunpack.c.l.b16 %v1850
        %v1957 = vunpack.c.h.b16 %v1850
        %v1958 = vunpack.c.l.b16 %v1851
        %v1959 = vunpack.c.h.b16 %v1851
        %v1960 = vunpack.c.l.b16 %v1852
        %v1961 = vunpack.c.h.b16 %v1852
        %v1962 = vpack.c.b16 %v1900, %v1898
        %v1963 = vpack.c.b16 %v1901, %v1899
        %v1964 = vpack.c.b16 %v1904, %v1902
        %v1965 = vpack.c.b16 %v1905, %v1903
        %v1966 = vpack.c.b16 %v1908, %v1906
        %v1967 = vpack.c.b16 %v1909, %v1907
        %v1968 = vpack.c.b16 %v1912, %v1910
        %v1969 = vpack.c.b16 %v1913, %v1911
        %v1970 = vpack.c.b16 %v1916, %v1914
        %v1971 = vpack.c.b16 %v1917, %v1915
        %v1972 = vpack.c.b16 %v1920, %v1918
        %v1973 = vpack.c.b16 %v1921, %v1919
        %v1974 = vpack.c.b16 %v1924, %v1922
        %v1975 = vpack.c.b16 %v1925, %v1923
        %v1976 = vpack.c.b16 %v1928, %v1926
        %v1977 = vpack.c.b16 %v1929, %v1927
        %v1978 = vpack.c.b16 %v1932, %v1930
        %v1979 = vpack.c.b16 %v1933, %v1931
        %v1980 = vpack.c.b16 %v1936, %v1934
        %v1981 = vpack.c.b16 %v1937, %v1935
        %v1982 = vpack.c.b16 %v1940, %v1938
        %v1983 = vpack.c.b16 %v1941, %v1939
        %v1984 = vpack.c.b16 %v1944, %v1942
        %v1985 = vpack.c.b16 %v1945, %v1943
        %v1986 = vpack.c.b16 %v1948, %v1946
        %v1987 = vpack.c.b16 %v1949, %v1947
        %v1988 = vpack.c.b16 %v1952, %v1950
        %v1989 = vpack.c.b16 %v1953, %v1951
        %v1990 = vpack.c.b16 %v1956, %v1954
        %v1991 = vpack.c.b16 %v1957, %v1955
        %v1992 = vpack.c.b16 %v1960, %v1958
        %v1993 = vpack.c.b16 %v1961, %v1959
        %2026 = vmatprep.subr.bf16.mxu0 %v1963
        %2027 = vmatpush1.bf16.msra.mxu0 %v1962
        %2028 = vmatprep.subr.bf16.mxu0 %v1965
        %2029 = vmatpush1.bf16.msra.mxu0 %v1964
        %2030 = vmatprep.subr.bf16.mxu0 %v1967
        %2031 = vmatpush1.bf16.msra.mxu0 %v1966
        %2032 = vmatprep.subr.bf16.mxu0 %v1969
        %2033 = vmatpush1.bf16.msra.mxu0 %v1968
        %2034 = vmatprep.subr.bf16.mxu0 %v1971
        %2035 = vmatpush1.bf16.msra.mxu0 %v1970
        %2036 = vmatprep.subr.bf16.mxu0 %v1973
        %2037 = vmatpush1.bf16.msra.mxu0 %v1972
        %2038 = vmatprep.subr.bf16.mxu0 %v1975
        %2039 = vmatpush1.bf16.msra.mxu0 %v1974
        %2040 = vmatprep.subr.bf16.mxu0 %v1977
        %2041 = vmatpush1.bf16.msra.mxu0 %v1976
        %2042 = vmatprep.subr.bf16.mxu0 %v1979
        %2043 = vmatpush1.bf16.msra.mxu0 %v1978
        %2044 = vmatprep.subr.bf16.mxu0 %v1981
        %2045 = vmatpush1.bf16.msra.mxu0 %v1980
        %2046 = vmatprep.subr.bf16.mxu0 %v1983
        %2047 = vmatpush1.bf16.msra.mxu0 %v1982
        %2048 = vmatprep.subr.bf16.mxu0 %v1985
        %2049 = vmatpush1.bf16.msra.mxu0 %v1984
        %2050 = vmatprep.subr.bf16.mxu0 %v1987
        %2051 = vmatpush1.bf16.msra.mxu0 %v1986
        %2052 = vmatprep.subr.bf16.mxu0 %v1989
        %2053 = vmatpush1.bf16.msra.mxu0 %v1988
        %2054 = vmatprep.subr.bf16.mxu0 %v1991
        %2055 = vmatpush1.bf16.msra.mxu0 %v1990
        %2056 = vmatprep.subr.bf16.mxu0 %v1993
        %2057 = vmatpush1.bf16.msra.mxu0 %v1992
        %2058 = vmatprep.mubr.bf16.mxu0 %v1819
        %2059 = vmatmul.mubr.bf16.gmra.mrb[0].mxu0 %v1818
        %v2060 = vpop.f32.mrb[0].mxu0
        %v2061 = vadd.f32 %v1859, %v2060
        %v2062 = vpop.f32.mrb[0].mxu0
        %v2063 = vadd.f32 %v1863, %v2062
        %v2064 = vpop.f32.mrb[0].mxu0
        %v2065 = vadd.f32 %v1859, %v2064
        %v2066 = vpop.f32.mrb[0].mxu0
        %v2067 = vadd.f32 %v1863, %v2066
        %2068 = vdwg.mxu0
        %v2069 = vmax.f32 %v2061, 0.0
        %v2070 = vmax.f32 %v2063, 0.0
        %v2071 = vmax.f32 %v2065, 0.0
        %v2072 = vmax.f32 %v2067, 0.0
        %v2073 = vadd.f32 %v1559, %v2069
        %v2074 = vadd.f32 %v1560, %v2070
        %v2075 = vadd.f32 %v1561, %v2071
        %v2076 = vadd.f32 %v1562, %v2072
        %v2077 = vpack.c.bf16 %v2075, %v2073
        %v2078 = vpack.c.bf16 %v2076, %v2074
        %s2079 = scalar_lea.vmem [#allocation2], 768
        %v2080 = vld [vmem:[%s2079] sm:$0xff]
        %v2081 = vld [vmem:[%s2079 + $0x8] sm:$0xff]
        %v2082 = vld [vmem:[%s2079 + $0x10] sm:$0xff]
        %v2083 = vld [vmem:[%s2079 + $0x18] sm:$0xff]
        %v2084 = vld [vmem:[%s2079 + $0x20] sm:$0xff]
        %v2085 = vld [vmem:[%s2079 + $0x28] sm:$0xff]
        %v2086 = vld [vmem:[%s2079 + $0x30] sm:$0xff]
        %v2087 = vld [vmem:[%s2079 + $0x38] sm:$0xff]
        %v2088 = vld [vmem:[%s2079 + $0x40] sm:$0xff]
        %v2089 = vld [vmem:[%s2079 + $0x48] sm:$0xff]
        %v2090 = vld [vmem:[%s2079 + $0x50] sm:$0xff]
        %v2091 = vld [vmem:[%s2079 + $0x58] sm:$0xff]
        %v2092 = vld [vmem:[%s2079 + $0x60] sm:$0xff]
        %v2093 = vld [vmem:[%s2079 + $0x68] sm:$0xff]
        %v2094 = vld [vmem:[%s2079 + $0x70] sm:$0xff]
        %v2095 = vld [vmem:[%s2079 + $0x78] sm:$0xff]
        %v2096 = vld [vmem:[%s2079 + $0x80] sm:$0xff]
        %v2097 = vld [vmem:[%s2079 + $0x88] sm:$0xff]
        %v2098 = vld [vmem:[%s2079 + $0x90] sm:$0xff]
        %v2099 = vld [vmem:[%s2079 + $0x98] sm:$0xff]
        %v2100 = vld [vmem:[%s2079 + $0xa0] sm:$0xff]
        %v2101 = vld [vmem:[%s2079 + $0xa8] sm:$0xff]
        %v2102 = vld [vmem:[%s2079 + $0xb0] sm:$0xff]
        %v2103 = vld [vmem:[%s2079 + $0xb8] sm:$0xff]
        %v2104 = vld [vmem:[%s2079 + $0xc0] sm:$0xff]
        %v2105 = vld [vmem:[%s2079 + $0xc8] sm:$0xff]
        %v2106 = vld [vmem:[%s2079 + $0xd0] sm:$0xff]
        %v2107 = vld [vmem:[%s2079 + $0xd8] sm:$0xff]
        %v2108 = vld [vmem:[%s2079 + $0xe0] sm:$0xff]
        %v2109 = vld [vmem:[%s2079 + $0xe8] sm:$0xff]
        %v2110 = vld [vmem:[%s2079 + $0xf0] sm:$0xff]
        %v2111 = vld [vmem:[%s2079 + $0xf8] sm:$0xff]
        %s2112 = scalar_lea.vmem [#allocation5], 6
        %v2113 = vld [vmem:[%s2112] sm:$0x3]
        %v2115 = vlaneseq
        %v2116 = vshrl.u32 %v2115, 7
        %v2117 = vsub.s32 0, %v2116
        %v2118 = vrot.slane %v2113, %v2117
        %v2119 = vlaneseq
        %v2120 = vshrl.u32 %v2119, 7
        %v2121 = vsub.s32 1, %v2120
        %v2122 = vrot.slane %v2113, %v2121
        %v2157 = vunpack.c.l.b16 %v2080
        %v2158 = vunpack.c.h.b16 %v2080
        %v2159 = vunpack.c.l.b16 %v2081
        %v2160 = vunpack.c.h.b16 %v2081
        %v2161 = vunpack.c.l.b16 %v2082
        %v2162 = vunpack.c.h.b16 %v2082
        %v2163 = vunpack.c.l.b16 %v2083
        %v2164 = vunpack.c.h.b16 %v2083
        %v2165 = vunpack.c.l.b16 %v2084
        %v2166 = vunpack.c.h.b16 %v2084
        %v2167 = vunpack.c.l.b16 %v2085
        %v2168 = vunpack.c.h.b16 %v2085
        %v2169 = vunpack.c.l.b16 %v2086
        %v2170 = vunpack.c.h.b16 %v2086
        %v2171 = vunpack.c.l.b16 %v2087
        %v2172 = vunpack.c.h.b16 %v2087
        %v2173 = vunpack.c.l.b16 %v2088
        %v2174 = vunpack.c.h.b16 %v2088
        %v2175 = vunpack.c.l.b16 %v2089
        %v2176 = vunpack.c.h.b16 %v2089
        %v2177 = vunpack.c.l.b16 %v2090
        %v2178 = vunpack.c.h.b16 %v2090
        %v2179 = vunpack.c.l.b16 %v2091
        %v2180 = vunpack.c.h.b16 %v2091
        %v2181 = vunpack.c.l.b16 %v2092
        %v2182 = vunpack.c.h.b16 %v2092
        %v2183 = vunpack.c.l.b16 %v2093
        %v2184 = vunpack.c.h.b16 %v2093
        %v2185 = vunpack.c.l.b16 %v2094
        %v2186 = vunpack.c.h.b16 %v2094
        %v2187 = vunpack.c.l.b16 %v2095
        %v2188 = vunpack.c.h.b16 %v2095
        %v2189 = vunpack.c.l.b16 %v2096
        %v2190 = vunpack.c.h.b16 %v2096
        %v2191 = vunpack.c.l.b16 %v2097
        %v2192 = vunpack.c.h.b16 %v2097
        %v2193 = vunpack.c.l.b16 %v2098
        %v2194 = vunpack.c.h.b16 %v2098
        %v2195 = vunpack.c.l.b16 %v2099
        %v2196 = vunpack.c.h.b16 %v2099
        %v2197 = vunpack.c.l.b16 %v2100
        %v2198 = vunpack.c.h.b16 %v2100
        %v2199 = vunpack.c.l.b16 %v2101
        %v2200 = vunpack.c.h.b16 %v2101
        %v2201 = vunpack.c.l.b16 %v2102
        %v2202 = vunpack.c.h.b16 %v2102
        %v2203 = vunpack.c.l.b16 %v2103
        %v2204 = vunpack.c.h.b16 %v2103
        %v2205 = vunpack.c.l.b16 %v2104
        %v2206 = vunpack.c.h.b16 %v2104
        %v2207 = vunpack.c.l.b16 %v2105
        %v2208 = vunpack.c.h.b16 %v2105
        %v2209 = vunpack.c.l.b16 %v2106
        %v2210 = vunpack.c.h.b16 %v2106
        %v2211 = vunpack.c.l.b16 %v2107
        %v2212 = vunpack.c.h.b16 %v2107
        %v2213 = vunpack.c.l.b16 %v2108
        %v2214 = vunpack.c.h.b16 %v2108
        %v2215 = vunpack.c.l.b16 %v2109
        %v2216 = vunpack.c.h.b16 %v2109
        %v2217 = vunpack.c.l.b16 %v2110
        %v2218 = vunpack.c.h.b16 %v2110
        %v2219 = vunpack.c.l.b16 %v2111
        %v2220 = vunpack.c.h.b16 %v2111
        %v2221 = vpack.c.b16 %v2159, %v2157
        %v2222 = vpack.c.b16 %v2160, %v2158
        %v2223 = vpack.c.b16 %v2163, %v2161
        %v2224 = vpack.c.b16 %v2164, %v2162
        %v2225 = vpack.c.b16 %v2167, %v2165
        %v2226 = vpack.c.b16 %v2168, %v2166
        %v2227 = vpack.c.b16 %v2171, %v2169
        %v2228 = vpack.c.b16 %v2172, %v2170
        %v2229 = vpack.c.b16 %v2175, %v2173
        %v2230 = vpack.c.b16 %v2176, %v2174
        %v2231 = vpack.c.b16 %v2179, %v2177
        %v2232 = vpack.c.b16 %v2180, %v2178
        %v2233 = vpack.c.b16 %v2183, %v2181
        %v2234 = vpack.c.b16 %v2184, %v2182
        %v2235 = vpack.c.b16 %v2187, %v2185
        %v2236 = vpack.c.b16 %v2188, %v2186
        %v2237 = vpack.c.b16 %v2191, %v2189
        %v2238 = vpack.c.b16 %v2192, %v2190
        %v2239 = vpack.c.b16 %v2195, %v2193
        %v2240 = vpack.c.b16 %v2196, %v2194
        %v2241 = vpack.c.b16 %v2199, %v2197
        %v2242 = vpack.c.b16 %v2200, %v2198
        %v2243 = vpack.c.b16 %v2203, %v2201
        %v2244 = vpack.c.b16 %v2204, %v2202
        %v2245 = vpack.c.b16 %v2207, %v2205
        %v2246 = vpack.c.b16 %v2208, %v2206
        %v2247 = vpack.c.b16 %v2211, %v2209
        %v2248 = vpack.c.b16 %v2212, %v2210
        %v2249 = vpack.c.b16 %v2215, %v2213
        %v2250 = vpack.c.b16 %v2216, %v2214
        %v2251 = vpack.c.b16 %v2219, %v2217
        %v2252 = vpack.c.b16 %v2220, %v2218
        %2285 = vmatprep.subr.bf16.mxu0 %v2222
        %2286 = vmatpush1.bf16.msra.mxu0 %v2221
        %2287 = vmatprep.subr.bf16.mxu0 %v2224
        %2288 = vmatpush1.bf16.msra.mxu0 %v2223
        %2289 = vmatprep.subr.bf16.mxu0 %v2226
        %2290 = vmatpush1.bf16.msra.mxu0 %v2225
        %2291 = vmatprep.subr.bf16.mxu0 %v2228
        %2292 = vmatpush1.bf16.msra.mxu0 %v2227
        %2293 = vmatprep.subr.bf16.mxu0 %v2230
        %2294 = vmatpush1.bf16.msra.mxu0 %v2229
        %2295 = vmatprep.subr.bf16.mxu0 %v2232
        %2296 = vmatpush1.bf16.msra.mxu0 %v2231
        %2297 = vmatprep.subr.bf16.mxu0 %v2234
        %2298 = vmatpush1.bf16.msra.mxu0 %v2233
        %2299 = vmatprep.subr.bf16.mxu0 %v2236
        %2300 = vmatpush1.bf16.msra.mxu0 %v2235
        %2301 = vmatprep.subr.bf16.mxu0 %v2238
        %2302 = vmatpush1.bf16.msra.mxu0 %v2237
        %2303 = vmatprep.subr.bf16.mxu0 %v2240
        %2304 = vmatpush1.bf16.msra.mxu0 %v2239
        %2305 = vmatprep.subr.bf16.mxu0 %v2242
        %2306 = vmatpush1.bf16.msra.mxu0 %v2241
        %2307 = vmatprep.subr.bf16.mxu0 %v2244
        %2308 = vmatpush1.bf16.msra.mxu0 %v2243
        %2309 = vmatprep.subr.bf16.mxu0 %v2246
        %2310 = vmatpush1.bf16.msra.mxu0 %v2245
        %2311 = vmatprep.subr.bf16.mxu0 %v2248
        %2312 = vmatpush1.bf16.msra.mxu0 %v2247
        %2313 = vmatprep.subr.bf16.mxu0 %v2250
        %2314 = vmatpush1.bf16.msra.mxu0 %v2249
        %2315 = vmatprep.subr.bf16.mxu0 %v2252
        %2316 = vmatpush1.bf16.msra.mxu0 %v2251
        %2317 = vmatprep.mubr.bf16.mxu0 %v2078
        %2318 = vmatmul.mubr.bf16.gmra.mrb[0].mxu0 %v2077
        %v2319 = vpop.f32.mrb[0].mxu0
        %v2320 = vadd.f32 %v2118, %v2319
        %v2321 = vpop.f32.mrb[0].mxu0
        %v2322 = vadd.f32 %v2122, %v2321
        %v2323 = vpop.f32.mrb[0].mxu0
        %v2324 = vadd.f32 %v2118, %v2323
        %v2325 = vpop.f32.mrb[0].mxu0
        %v2326 = vadd.f32 %v2122, %v2325
        %2327 = vdwg.mxu0
        %v2328 = vmax.f32 %v2320, 0.0
        %v2329 = vmax.f32 %v2322, 0.0
        %v2330 = vmax.f32 %v2324, 0.0
        %v2331 = vmax.f32 %v2326, 0.0
        %v2332 = vpack.c.bf16 %v2330, %v2328
        %v2333 = vpack.c.bf16 %v2331, %v2329
        %s2334 = scalar_lea.vmem [#allocation7], 768
        %v2335 = vld [vmem:[%s2334] sm:$0xff]
        %v2336 = vld [vmem:[%s2334 + $0x8] sm:$0xff]
        %v2337 = vld [vmem:[%s2334 + $0x10] sm:$0xff]
        %v2338 = vld [vmem:[%s2334 + $0x18] sm:$0xff]
        %v2339 = vld [vmem:[%s2334 + $0x20] sm:$0xff]
        %v2340 = vld [vmem:[%s2334 + $0x28] sm:$0xff]
        %v2341 = vld [vmem:[%s2334 + $0x30] sm:$0xff]
        %v2342 = vld [vmem:[%s2334 + $0x38] sm:$0xff]
        %v2343 = vld [vmem:[%s2334 + $0x40] sm:$0xff]
        %v2344 = vld [vmem:[%s2334 + $0x48] sm:$0xff]
        %v2345 = vld [vmem:[%s2334 + $0x50] sm:$0xff]
        %v2346 = vld [vmem:[%s2334 + $0x58] sm:$0xff]
        %v2347 = vld [vmem:[%s2334 + $0x60] sm:$0xff]
        %v2348 = vld [vmem:[%s2334 + $0x68] sm:$0xff]
        %v2349 = vld [vmem:[%s2334 + $0x70] sm:$0xff]
        %v2350 = vld [vmem:[%s2334 + $0x78] sm:$0xff]
        %v2351 = vld [vmem:[%s2334 + $0x80] sm:$0xff]
        %v2352 = vld [vmem:[%s2334 + $0x88] sm:$0xff]
        %v2353 = vld [vmem:[%s2334 + $0x90] sm:$0xff]
        %v2354 = vld [vmem:[%s2334 + $0x98] sm:$0xff]
        %v2355 = vld [vmem:[%s2334 + $0xa0] sm:$0xff]
        %v2356 = vld [vmem:[%s2334 + $0xa8] sm:$0xff]
        %v2357 = vld [vmem:[%s2334 + $0xb0] sm:$0xff]
        %v2358 = vld [vmem:[%s2334 + $0xb8] sm:$0xff]
        %v2359 = vld [vmem:[%s2334 + $0xc0] sm:$0xff]
        %v2360 = vld [vmem:[%s2334 + $0xc8] sm:$0xff]
        %v2361 = vld [vmem:[%s2334 + $0xd0] sm:$0xff]
        %v2362 = vld [vmem:[%s2334 + $0xd8] sm:$0xff]
        %v2363 = vld [vmem:[%s2334 + $0xe0] sm:$0xff]
        %v2364 = vld [vmem:[%s2334 + $0xe8] sm:$0xff]
        %v2365 = vld [vmem:[%s2334 + $0xf0] sm:$0xff]
        %v2366 = vld [vmem:[%s2334 + $0xf8] sm:$0xff]
        %s2367 = scalar_lea.vmem [#allocation8], 6
        %v2368 = vld [vmem:[%s2367] sm:$0x3]
        %v2370 = vlaneseq
        %v2371 = vshrl.u32 %v2370, 7
        %v2372 = vsub.s32 0, %v2371
        %v2373 = vrot.slane %v2368, %v2372
        %v2374 = vlaneseq
        %v2375 = vshrl.u32 %v2374, 7
        %v2376 = vsub.s32 1, %v2375
        %v2377 = vrot.slane %v2368, %v2376
        %v2412 = vunpack.c.l.b16 %v2335
        %v2413 = vunpack.c.h.b16 %v2335
        %v2414 = vunpack.c.l.b16 %v2336
        %v2415 = vunpack.c.h.b16 %v2336
        %v2416 = vunpack.c.l.b16 %v2337
        %v2417 = vunpack.c.h.b16 %v2337
        %v2418 = vunpack.c.l.b16 %v2338
        %v2419 = vunpack.c.h.b16 %v2338
        %v2420 = vunpack.c.l.b16 %v2339
        %v2421 = vunpack.c.h.b16 %v2339
        %v2422 = vunpack.c.l.b16 %v2340
        %v2423 = vunpack.c.h.b16 %v2340
        %v2424 = vunpack.c.l.b16 %v2341
        %v2425 = vunpack.c.h.b16 %v2341
        %v2426 = vunpack.c.l.b16 %v2342
        %v2427 = vunpack.c.h.b16 %v2342
        %v2428 = vunpack.c.l.b16 %v2343
        %v2429 = vunpack.c.h.b16 %v2343
        %v2430 = vunpack.c.l.b16 %v2344
        %v2431 = vunpack.c.h.b16 %v2344
        %v2432 = vunpack.c.l.b16 %v2345
        %v2433 = vunpack.c.h.b16 %v2345
        %v2434 = vunpack.c.l.b16 %v2346
        %v2435 = vunpack.c.h.b16 %v2346
        %v2436 = vunpack.c.l.b16 %v2347
        %v2437 = vunpack.c.h.b16 %v2347
        %v2438 = vunpack.c.l.b16 %v2348
        %v2439 = vunpack.c.h.b16 %v2348
        %v2440 = vunpack.c.l.b16 %v2349
        %v2441 = vunpack.c.h.b16 %v2349
        %v2442 = vunpack.c.l.b16 %v2350
        %v2443 = vunpack.c.h.b16 %v2350
        %v2444 = vunpack.c.l.b16 %v2351
        %v2445 = vunpack.c.h.b16 %v2351
        %v2446 = vunpack.c.l.b16 %v2352
        %v2447 = vunpack.c.h.b16 %v2352
        %v2448 = vunpack.c.l.b16 %v2353
        %v2449 = vunpack.c.h.b16 %v2353
        %v2450 = vunpack.c.l.b16 %v2354
        %v2451 = vunpack.c.h.b16 %v2354
        %v2452 = vunpack.c.l.b16 %v2355
        %v2453 = vunpack.c.h.b16 %v2355
        %v2454 = vunpack.c.l.b16 %v2356
        %v2455 = vunpack.c.h.b16 %v2356
        %v2456 = vunpack.c.l.b16 %v2357
        %v2457 = vunpack.c.h.b16 %v2357
        %v2458 = vunpack.c.l.b16 %v2358
        %v2459 = vunpack.c.h.b16 %v2358
        %v2460 = vunpack.c.l.b16 %v2359
        %v2461 = vunpack.c.h.b16 %v2359
        %v2462 = vunpack.c.l.b16 %v2360
        %v2463 = vunpack.c.h.b16 %v2360
        %v2464 = vunpack.c.l.b16 %v2361
        %v2465 = vunpack.c.h.b16 %v2361
        %v2466 = vunpack.c.l.b16 %v2362
        %v2467 = vunpack.c.h.b16 %v2362
        %v2468 = vunpack.c.l.b16 %v2363
        %v2469 = vunpack.c.h.b16 %v2363
        %v2470 = vunpack.c.l.b16 %v2364
        %v2471 = vunpack.c.h.b16 %v2364
        %v2472 = vunpack.c.l.b16 %v2365
        %v2473 = vunpack.c.h.b16 %v2365
        %v2474 = vunpack.c.l.b16 %v2366
        %v2475 = vunpack.c.h.b16 %v2366
        %v2476 = vpack.c.b16 %v2414, %v2412
        %v2477 = vpack.c.b16 %v2415, %v2413
        %v2478 = vpack.c.b16 %v2418, %v2416
        %v2479 = vpack.c.b16 %v2419, %v2417
        %v2480 = vpack.c.b16 %v2422, %v2420
        %v2481 = vpack.c.b16 %v2423, %v2421
        %v2482 = vpack.c.b16 %v2426, %v2424
        %v2483 = vpack.c.b16 %v2427, %v2425
        %v2484 = vpack.c.b16 %v2430, %v2428
        %v2485 = vpack.c.b16 %v2431, %v2429
        %v2486 = vpack.c.b16 %v2434, %v2432
        %v2487 = vpack.c.b16 %v2435, %v2433
        %v2488 = vpack.c.b16 %v2438, %v2436
        %v2489 = vpack.c.b16 %v2439, %v2437
        %v2490 = vpack.c.b16 %v2442, %v2440
        %v2491 = vpack.c.b16 %v2443, %v2441
        %v2492 = vpack.c.b16 %v2446, %v2444
        %v2493 = vpack.c.b16 %v2447, %v2445
        %v2494 = vpack.c.b16 %v2450, %v2448
        %v2495 = vpack.c.b16 %v2451, %v2449
        %v2496 = vpack.c.b16 %v2454, %v2452
        %v2497 = vpack.c.b16 %v2455, %v2453
        %v2498 = vpack.c.b16 %v2458, %v2456
        %v2499 = vpack.c.b16 %v2459, %v2457
        %v2500 = vpack.c.b16 %v2462, %v2460
        %v2501 = vpack.c.b16 %v2463, %v2461
        %v2502 = vpack.c.b16 %v2466, %v2464
        %v2503 = vpack.c.b16 %v2467, %v2465
        %v2504 = vpack.c.b16 %v2470, %v2468
        %v2505 = vpack.c.b16 %v2471, %v2469
        %v2506 = vpack.c.b16 %v2474, %v2472
        %v2507 = vpack.c.b16 %v2475, %v2473
        %2540 = vmatprep.subr.bf16.mxu0 %v2477
        %2541 = vmatpush1.bf16.msra.mxu0 %v2476
        %2542 = vmatprep.subr.bf16.mxu0 %v2479
        %2543 = vmatpush1.bf16.msra.mxu0 %v2478
        %2544 = vmatprep.subr.bf16.mxu0 %v2481
        %2545 = vmatpush1.bf16.msra.mxu0 %v2480
        %2546 = vmatprep.subr.bf16.mxu0 %v2483
        %2547 = vmatpush1.bf16.msra.mxu0 %v2482
        %2548 = vmatprep.subr.bf16.mxu0 %v2485
        %2549 = vmatpush1.bf16.msra.mxu0 %v2484
        %2550 = vmatprep.subr.bf16.mxu0 %v2487
        %2551 = vmatpush1.bf16.msra.mxu0 %v2486
        %2552 = vmatprep.subr.bf16.mxu0 %v2489
        %2553 = vmatpush1.bf16.msra.mxu0 %v2488
        %2554 = vmatprep.subr.bf16.mxu0 %v2491
        %2555 = vmatpush1.bf16.msra.mxu0 %v2490
        %2556 = vmatprep.subr.bf16.mxu0 %v2493
        %2557 = vmatpush1.bf16.msra.mxu0 %v2492
        %2558 = vmatprep.subr.bf16.mxu0 %v2495
        %2559 = vmatpush1.bf16.msra.mxu0 %v2494
        %2560 = vmatprep.subr.bf16.mxu0 %v2497
        %2561 = vmatpush1.bf16.msra.mxu0 %v2496
        %2562 = vmatprep.subr.bf16.mxu0 %v2499
        %2563 = vmatpush1.bf16.msra.mxu0 %v2498
        %2564 = vmatprep.subr.bf16.mxu0 %v2501
        %2565 = vmatpush1.bf16.msra.mxu0 %v2500
        %2566 = vmatprep.subr.bf16.mxu0 %v2503
        %2567 = vmatpush1.bf16.msra.mxu0 %v2502
        %2568 = vmatprep.subr.bf16.mxu0 %v2505
        %2569 = vmatpush1.bf16.msra.mxu0 %v2504
        %2570 = vmatprep.subr.bf16.mxu0 %v2507
        %2571 = vmatpush1.bf16.msra.mxu0 %v2506
        %2572 = vmatprep.mubr.bf16.mxu0 %v2333
        %2573 = vmatmul.mubr.bf16.gmra.mrb[0].mxu0 %v2332
        %v2574 = vpop.f32.mrb[0].mxu0
        %v2575 = vadd.f32 %v2373, %v2574
        %v2576 = vpop.f32.mrb[0].mxu0
        %v2577 = vadd.f32 %v2377, %v2576
        %v2578 = vpop.f32.mrb[0].mxu0
        %v2579 = vadd.f32 %v2373, %v2578
        %v2580 = vpop.f32.mrb[0].mxu0
        %v2581 = vadd.f32 %v2377, %v2580
        %2582 = vdwg.mxu0
        %v2583 = vmax.f32 %v2575, 0.0
        %v2584 = vmax.f32 %v2577, 0.0
        %v2585 = vmax.f32 %v2579, 0.0
        %v2586 = vmax.f32 %v2581, 0.0
        %v2587 = vadd.f32 %v2073, %v2583
        %v2588 = vadd.f32 %v2074, %v2584
        %v2589 = vadd.f32 %v2075, %v2585
        %v2590 = vadd.f32 %v2076, %v2586
        %v2591 = vpack.c.bf16 %v2589, %v2587
        %v2592 = vpack.c.bf16 %v2590, %v2588
        %v2593 = vld [vmem:[#allocation10] sm:$0xf]
        %v2594 = vld [vmem:[#allocation10 + $0x4] sm:$0xf]
        %v2595 = vld [vmem:[#allocation10 + $0x8] sm:$0xf]
        %v2596 = vld [vmem:[#allocation10 + $0xc] sm:$0xf]
        %v2597 = vld [vmem:[#allocation10 + $0x10] sm:$0xf]
        %v2598 = vld [vmem:[#allocation10 + $0x14] sm:$0xf]
        %v2599 = vld [vmem:[#allocation10 + $0x18] sm:$0xf]
        %v2600 = vld [vmem:[#allocation10 + $0x1c] sm:$0xf]
        %v2601 = vld [vmem:[#allocation10 + $0x20] sm:$0xf]
        %v2602 = vld [vmem:[#allocation10 + $0x24] sm:$0xf]
        %v2603 = vld [vmem:[#allocation10 + $0x28] sm:$0xf]
        %v2604 = vld [vmem:[#allocation10 + $0x2c] sm:$0xf]
        %v2605 = vld [vmem:[#allocation10 + $0x30] sm:$0xf]
        %v2606 = vld [vmem:[#allocation10 + $0x34] sm:$0xf]
        %v2607 = vld [vmem:[#allocation10 + $0x38] sm:$0xf]
        %v2608 = vld [vmem:[#allocation10 + $0x3c] sm:$0xf]
        %v2609 = vld [vmem:[#allocation10 + $0x40] sm:$0xf]
        %v2610 = vld [vmem:[#allocation10 + $0x44] sm:$0xf]
        %v2611 = vld [vmem:[#allocation10 + $0x48] sm:$0xf]
        %v2612 = vld [vmem:[#allocation10 + $0x4c] sm:$0xf]
        %v2613 = vld [vmem:[#allocation10 + $0x50] sm:$0xf]
        %v2614 = vld [vmem:[#allocation10 + $0x54] sm:$0xf]
        %v2615 = vld [vmem:[#allocation10 + $0x58] sm:$0xf]
        %v2616 = vld [vmem:[#allocation10 + $0x5c] sm:$0xf]
        %v2617 = vld [vmem:[#allocation10 + $0x60] sm:$0xf]
        %v2618 = vld [vmem:[#allocation10 + $0x64] sm:$0xf]
        %v2619 = vld [vmem:[#allocation10 + $0x68] sm:$0xf]
        %v2620 = vld [vmem:[#allocation10 + $0x6c] sm:$0xf]
        %v2621 = vld [vmem:[#allocation10 + $0x70] sm:$0xf]
        %v2622 = vld [vmem:[#allocation10 + $0x74] sm:$0xf]
        %v2623 = vld [vmem:[#allocation10 + $0x78] sm:$0xf]
        %v2624 = vld [vmem:[#allocation10 + $0x7c] sm:$0xf]
        %v2657 = vunpack.c.l.b16 %v2593
        %v2658 = vunpack.c.l.b16 %v2594
        %v2659 = vunpack.c.l.b16 %v2595
        %v2660 = vunpack.c.l.b16 %v2596
        %v2661 = vunpack.c.l.b16 %v2597
        %v2662 = vunpack.c.l.b16 %v2598
        %v2663 = vunpack.c.l.b16 %v2599
        %v2664 = vunpack.c.l.b16 %v2600
        %v2665 = vunpack.c.l.b16 %v2601
        %v2666 = vunpack.c.l.b16 %v2602
        %v2667 = vunpack.c.l.b16 %v2603
        %v2668 = vunpack.c.l.b16 %v2604
        %v2669 = vunpack.c.l.b16 %v2605
        %v2670 = vunpack.c.l.b16 %v2606
        %v2671 = vunpack.c.l.b16 %v2607
        %v2672 = vunpack.c.l.b16 %v2608
        %v2673 = vunpack.c.l.b16 %v2609
        %v2674 = vunpack.c.l.b16 %v2610
        %v2675 = vunpack.c.l.b16 %v2611
        %v2676 = vunpack.c.l.b16 %v2612
        %v2677 = vunpack.c.l.b16 %v2613
        %v2678 = vunpack.c.l.b16 %v2614
        %v2679 = vunpack.c.l.b16 %v2615
        %v2680 = vunpack.c.l.b16 %v2616
        %v2681 = vunpack.c.l.b16 %v2617
        %v2682 = vunpack.c.l.b16 %v2618
        %v2683 = vunpack.c.l.b16 %v2619
        %v2684 = vunpack.c.l.b16 %v2620
        %v2685 = vunpack.c.l.b16 %v2621
        %v2686 = vunpack.c.l.b16 %v2622
        %v2687 = vunpack.c.l.b16 %v2623
        %v2688 = vunpack.c.l.b16 %v2624
        %v2689 = vpack.c.b16 %v2658, %v2657
        %v2690 = vpack.c.b16 %v2660, %v2659
        %v2691 = vpack.c.b16 %v2662, %v2661
        %v2692 = vpack.c.b16 %v2664, %v2663
        %v2693 = vpack.c.b16 %v2666, %v2665
        %v2694 = vpack.c.b16 %v2668, %v2667
        %v2695 = vpack.c.b16 %v2670, %v2669
        %v2696 = vpack.c.b16 %v2672, %v2671
        %v2697 = vpack.c.b16 %v2674, %v2673
        %v2698 = vpack.c.b16 %v2676, %v2675
        %v2699 = vpack.c.b16 %v2678, %v2677
        %v2700 = vpack.c.b16 %v2680, %v2679
        %v2701 = vpack.c.b16 %v2682, %v2681
        %v2702 = vpack.c.b16 %v2684, %v2683
        %v2703 = vpack.c.b16 %v2686, %v2685
        %v2704 = vpack.c.b16 %v2688, %v2687
        %2721 = vmatprep.subr.bf16.mxu0 0
        %2722 = vmatpush1.bf16.msra.mxu0 %v2689
        %2723 = vmatprep.subr.bf16.mxu0 0
        %2724 = vmatpush1.bf16.msra.mxu0 %v2690
        %2725 = vmatprep.subr.bf16.mxu0 0
        %2726 = vmatpush1.bf16.msra.mxu0 %v2691
        %2727 = vmatprep.subr.bf16.mxu0 0
        %2728 = vmatpush1.bf16.msra.mxu0 %v2692
        %2729 = vmatprep.subr.bf16.mxu0 0
        %2730 = vmatpush1.bf16.msra.mxu0 %v2693
        %2731 = vmatprep.subr.bf16.mxu0 0
        %2732 = vmatpush1.bf16.msra.mxu0 %v2694
        %2733 = vmatprep.subr.bf16.mxu0 0
        %2734 = vmatpush1.bf16.msra.mxu0 %v2695
        %2735 = vmatprep.subr.bf16.mxu0 0
        %2736 = vmatpush1.bf16.msra.mxu0 %v2696
        %2737 = vmatprep.subr.bf16.mxu0 0
        %2738 = vmatpush1.bf16.msra.mxu0 %v2697
        %2739 = vmatprep.subr.bf16.mxu0 0
        %2740 = vmatpush1.bf16.msra.mxu0 %v2698
        %2741 = vmatprep.subr.bf16.mxu0 0
        %2742 = vmatpush1.bf16.msra.mxu0 %v2699
        %2743 = vmatprep.subr.bf16.mxu0 0
        %2744 = vmatpush1.bf16.msra.mxu0 %v2700
        %2745 = vmatprep.subr.bf16.mxu0 0
        %2746 = vmatpush1.bf16.msra.mxu0 %v2701
        %2747 = vmatprep.subr.bf16.mxu0 0
        %2748 = vmatpush1.bf16.msra.mxu0 %v2702
        %2749 = vmatprep.subr.bf16.mxu0 0
        %2750 = vmatpush1.bf16.msra.mxu0 %v2703
        %2751 = vmatprep.subr.bf16.mxu0 0
        %2752 = vmatpush1.bf16.msra.mxu0 %v2704
        %2753 = vmatprep.mubr.bf16.mxu0 %v2592
        %2754 = vmatmul.mubr.bf16.gmra.mrb[0].mxu0 %v2591
        %v2755 = vpop.f32.mrb[0].mxu0
        %v2756 = vadd.f32 0.0, %v2755
        %v2757 = vpop.f32.mrb[0].mxu0
        %v2758 = vpop.f32.mrb[0].mxu0
        %v2759 = vadd.f32 0.0, %v2758
        %v2760 = vpop.f32.mrb[0].mxu0
        %2761 = vdwg.mxu0
        %2762 = vst [vmem:[%s372] sm:$0xff] %v2756
        %2763 = vst [vmem:[%s372 + $0x8] sm:$0xff] %v2759
        %s2764 = sand.u32 %s206, 1
        %s2765 = scalar_lea.sflag [#allocation4], %s2764
        %s2766 = sand.u32 %s206, 1
        %s2767 = smul.addr %s2766, 16
        %s2768 = scalar_lea.vmem [#allocation11], %s2767
        // Predicated region
        $region73: #{fcnet_forward.1} parent=51 // pred_check
          %p2769 = pneg %p216
        $region74: #{fcnet_forward.1} parent=51 // pred_check_branch
          %2771 = sbr.rel (%p2769) target = $region76
        $region75: #{fcnet_forward.1} parent=51 // pred_region
          %s2772 = smul.u32 2, %s25
          %s2774 = ssub.s32 256, 256
          %2775 = vsyncadd %s2765, %s2774
          %s2776 = smul.addr %s2772, 128
          %s2777 = scalar_lea.hbm %s8, %s2776
          %s2778 = sshll.u32 %s2768, 4
          %s2779 = int_to_ptr.vmem [resolvable:$true] %s2778
          %2784 = dma.vmem_to_hbm [thread:$0]  %s2779, 256, %s2777, %s2765, 128, 128, 8
        $region76: #{fcnet_forward.1} parent=51 // pred_fallthru
          _
      $region52: #{fcnet_forward.1} parent=5 // pred_fallthru
        _
      %p2785 = scmp.le.s32.totalorder 2, %s20
      // Predicated region
      $region77: #{fcnet_forward.1} parent=5 // pred_check
        %p2786 = pneg %p2785
      $region78: #{fcnet_forward.1} parent=5 // pred_check_branch
        %2788 = sbr.rel (%p2786) target = $region80
      $region79: #{fcnet_forward.1} parent=5 // pred_region
        %s2789 = ssub.s32 %s20, 2
        // Predicated region
        $region81: #{fcnet_forward.1} parent=79 // pred_check
          %p2790 = pneg %p222
        $region82: #{fcnet_forward.1} parent=79 // pred_check_branch
          %2792 = sbr.rel (%p2790) target = $region84
        $region83: #{fcnet_forward.1} parent=79 // pred_region
          %s2793 = sand.u32 %s207, 1
          %s2794 = scalar_lea.sflag [#allocation4], %s2793
          %s2795 = sand.u32 %s207, 1
          %s2796 = smul.addr %s2795, 16
          %s2797 = scalar_lea.vmem [#allocation11], %s2796
          %2798 = dma.done %s2794, 256
        $region84: #{fcnet_forward.1} parent=79 // pred_fallthru
          _
      $region80: #{fcnet_forward.1} parent=5 // pred_fallthru
        _
    $region6: #{fcnet_forward.1} parent=1 // loop_footer
      %s24 = sadd.s32 1, %s20
    $region7: #{fcnet_forward.1} parent=1 // loop_footer_branch
      %19 = sbr.rel target = $region3
    $region8: #{fcnet_forward.1} parent=1 // loop_exit
      _
    %2799 = vsyncpa [#allocation3], 1
    %s2800 = scalar_lea.sflag [#allocation3], 1
    %2801 = vsyncpa %s2800, 1
    %2802 = vsyncpa [#allocation6], 1
    %2803 = vsyncpa [#allocation9], 1
    %2804 = vsyncpa [#allocation4], 1
    %s2805 = scalar_lea.sflag [#allocation4], 1
    %2806 = vsyncpa %s2805, 1

</llo_original>
